<compile_context>
chip_gen: v7x
topology: tpu7x:2x2x1
jax: 0.10.0
libtpu: 0.0.40
codegen_flags: <defaults>
</compile_context>

<pallas_src>
import functools

import numpy as np
import jax
import jax.numpy as jnp
from jax.experimental import pallas as pl
from jax.experimental.pallas import tpu as pltpu

_PARALLEL_1D = pltpu.CompilerParams(dimension_semantics=("parallel",))


# --------------------------------------------------------------------------
# conv 3x3 / stride 2 / pad 1  (bias + ReLU fused, optional fused 1x1 head)
# --------------------------------------------------------------------------
def _conv_kernel(p_ref, w_ref, b_ref, *rest, fuse_head):
    if fuse_head:
        wh_ref, bh_ref, o_ref = rest
    else:
        (o_ref,) = rest
    acc = jnp.dot(p_ref[0], w_ref[...], preferred_element_type=jnp.float32)
    acc = jnp.maximum(acc + b_ref[...], 0.0)
    if fuse_head:
        acc = jnp.dot(acc, wh_ref[...],
                      preferred_element_type=jnp.float32) + bh_ref[...]
    o_ref[0] = acc.astype(o_ref.dtype)


def conv3x3_s2(x, w, b, wh=None, bh=None):
    """NHWC 3x3 conv, stride 2, pad 1, fused bias+ReLU (+ optional 1x1 head)."""
    B, H, W, Cin = x.shape
    Cout = w.shape[-1]
    Ho, Wo = (H - 1) // 2 + 1, (W - 1) // 2 + 1

    xp = jnp.pad(x, ((0, 0), (1, 1), (1, 1), (0, 0)))
    # strided patch slices (stride-2 conv => only 2.25x expansion); stacked so
    # the reshape to (B, Ho*Wo, 9*Cin) is contiguous (no relayout).  Pre-cast
    # to bf16: halves the HBM->VMEM traffic of the dominant conv operand.
    cols = [xp[:, ki:ki + 2 * Ho - 1:2, kj:kj + 2 * Wo - 1:2, :]
            for ki in range(3) for kj in range(3)]
    patches = jnp.stack(cols, axis=3).reshape(B, Ho * Wo, 9 * Cin)
    patches = patches.astype(jnp.bfloat16)

    wmat = jnp.asarray(w).reshape(9 * Cin, Cout).astype(jnp.bfloat16)
    brow = jnp.asarray(b, jnp.float32).reshape(1, Cout)

    fuse = wh is not None
    n_out = wh.shape[-1] if fuse else Cout

    ins = [patches, wmat, brow]
    in_specs = [
        pl.BlockSpec((1, Ho * Wo, 9 * Cin), lambda i: (i, 0, 0)),
        pl.BlockSpec((9 * Cin, Cout), lambda i: (0, 0)),
        pl.BlockSpec((1, Cout), lambda i: (0, 0)),
    ]
    if fuse:
        ins += [jnp.asarray(wh, jnp.float32),
                jnp.asarray(bh, jnp.float32).reshape(1, n_out)]
        in_specs += [pl.BlockSpec((Cout, n_out), lambda i: (0, 0)),
                     pl.BlockSpec((1, n_out), lambda i: (0, 0))]

    out = pl.pallas_call(
        functools.partial(_conv_kernel, fuse_head=fuse),
        out_shape=jax.ShapeDtypeStruct((B, Ho * Wo, n_out), jnp.float32),
        grid=(B,),
        in_specs=in_specs,
        out_specs=pl.BlockSpec((1, Ho * Wo, n_out), lambda i: (i, 0, 0)),
        compiler_params=_PARALLEL_1D,
    )(*ins)
    return out.reshape(B, Ho, Wo, n_out)


# --------------------------------------------------------------------------
# bilinear resize (align_corners=True), both passes fused in one kernel,
# optional fused accumulation into an existing buffer (TTA sum over scales)
# --------------------------------------------------------------------------
def _resize_kernel(x_ref, rh_ref, rw_ref, *rest, accumulate):
    if accumulate:
        acc_ref, o_ref = rest
    else:
        (o_ref,) = rest
    t = jnp.dot(rh_ref[...], x_ref[0], preferred_element_type=jnp.float32)
    y = jnp.dot(t, rw_ref[...], preferred_element_type=jnp.float32)
    if accumulate:
        y = y + acc_ref[0]
    o_ref[0] = y


def _interp_matrix(out_size, in_size):
    """Row-stochastic bilinear interpolation matrix, align_corners=True."""
    if in_size == 1:
        return np.ones((out_size, 1), np.float32)
    if out_size == 1:
        m = np.zeros((1, in_size), np.float32)
        m[0, 0] = 1.0
        return m
    pos = np.arange(out_size, dtype=np.float64) * (in_size - 1) / (out_size - 1)
    lo = np.clip(np.floor(pos).astype(np.int64), 0, in_size - 1)
    hi = np.minimum(lo + 1, in_size - 1)
    frac = (pos - lo).astype(np.float32)
    rows = np.arange(out_size)
    m = np.zeros((out_size, in_size), np.float32)
    m[rows, lo] += 1.0 - frac
    m[rows, hi] += frac
    return m


def bilinear_resize_nhwc(x, out_h, out_w, accumulate=None):
    """F.interpolate(..., 'bilinear', align_corners=True) on NHWC tensors.

    Per-image kernel computes Rh @ x @ kron(Rw^T, I_C) with x viewed as
    (H, W*C): lane-dense, no intermediate HBM round-trip, no transposes.
    When `accumulate` is given the result is added into it in-kernel via
    input_output_aliases (no separate add pass).
    """
    B, H, W, C = x.shape
    if (out_h, out_w) == (H, W):
        # identity resize; plain (XLA-fused) add keeps semantics
        return x if accumulate is None else accumulate + x

    rh = jnp.asarray(_interp_matrix(out_h, H))                          # (Ho, H)
    rw = jnp.asarray(np.kron(_interp_matrix(out_w, W).T,
                             np.eye(C, dtype=np.float32)))              # (W*C, Wo*C)
    x2 = x.reshape(B, H, W * C)

    ins = [x2, rh, rw]
    in_specs = [pl.BlockSpec((1, H, W * C), lambda i: (i, 0, 0)),
                pl.BlockSpec((out_h, H), lambda i: (0, 0)),
                pl.BlockSpec((W * C, out_w * C), lambda i: (0, 0))]
    io_alias = {}
    fuse_acc = accumulate is not None
    if fuse_acc:
        ins.append(accumulate.reshape(B, out_h, out_w * C))
        in_specs.append(pl.BlockSpec((1, out_h, out_w * C), lambda i: (i, 0, 0)))
        io_alias = {3: 0}

    out = pl.pallas_call(
        functools.partial(_resize_kernel, accumulate=fuse_acc),
        out_shape=jax.ShapeDtypeStruct((B, out_h, out_w * C), jnp.float32),
        grid=(B,),
        in_specs=in_specs,
        out_specs=pl.BlockSpec((1, out_h, out_w * C), lambda i: (i, 0, 0)),
        input_output_aliases=io_alias,
        compiler_params=_PARALLEL_1D,
    )(*ins)
    return out.reshape(B, out_h, out_w, C)


# --------------------------------------------------------------------------
# channel softmax (softmax over the last NHWC axis == PyTorch dim=1 on NCHW)
# --------------------------------------------------------------------------
def _softmax_kernel(x_ref, o_ref):
    x = x_ref[...]
    e = jnp.exp(x - jnp.max(x, axis=-1, keepdims=True))
    o_ref[...] = e * pl.reciprocal(jnp.sum(e, axis=-1, keepdims=True), approx=True)


def softmax_channels_nhwc(x):
    B, H, W, C = x.shape
    rows = B * H * W
    x2 = x.reshape(rows, C)
    tm = 4096
    while tm > 8 and rows % tm:      # keep the row tile an exact divisor
        tm //= 2
    out = pl.pallas_call(
        _softmax_kernel,
        out_shape=jax.ShapeDtypeStruct((rows, C), jnp.float32),
        grid=(pl.cdiv(rows, tm),),
        in_specs=[pl.BlockSpec((tm, C), lambda i: (i, 0))],
        out_specs=pl.BlockSpec((tm, C), lambda i: (i, 0)),
        compiler_params=_PARALLEL_1D,
    )(x2)
    return out.reshape(B, H, W, C)


# --------------------------------------------------------------------------
# BaseNet
# --------------------------------------------------------------------------
# TODO(synk): real resnet50/101 pretrained backbone + task head live outside
# the reference file; replaced by a small deterministic synthetic backbone
# (two stride-2 conv+ReLU stages) and a 1x1 head with the same contract.
def init_params(key, in_ch=3, c1=16, c2=32, num_classes=8):
    k0, k1, k2 = jax.random.split(key, 3)
    s = 0.1
    return {
        "w1": s * jax.random.normal(k0, (3, 3, in_ch, c1), jnp.float32),
        "b1": jnp.zeros((c1,), jnp.float32),
        "w2": s * jax.random.normal(k1, (3, 3, c1, c2), jnp.float32),
        "b2": jnp.zeros((c2,), jnp.float32),
        "wh": s * jax.random.normal(k2, (c2, num_classes), jnp.float32),
        "bh": jnp.zeros((num_classes,), jnp.float32),
    }


def base_forward_nhwc(params, x):
    """backbone features -> 1x1 head (fused) -> bilinear upsample to input res."""
    _, H, W, _ = x.shape
    f = conv3x3_s2(x, params["w1"], params["b1"])                       # H/2
    y = conv3x3_s2(f, params["w2"], params["b2"],
                   wh=params["wh"], bh=params["bh"])                    # H/4, head fused
    return bilinear_resize_nhwc(y, H, W)


def _forward_impl(params, x_nchw, tta):
    x = jnp.transpose(x_nchw, (0, 2, 3, 1))          # NCHW -> NHWC once
    if not tta:
        y = base_forward_nhwc(params, x)
    else:
        N, H, W, _ = x.shape
        # batch the horizontal-flip branch with the plain branch
        x2 = jnp.concatenate([x, jnp.flip(x, axis=2)], axis=0)
        acc = None
        for s in (0.5, 0.75, 1.0, 1.5, 2.0):
            ch, cw = int(H * s), int(W * s)
            cur = bilinear_resize_nhwc(x2, ch, cw)
            out = softmax_channels_nhwc(base_forward_nhwc(params, cur))
            # upsample to (H, W) with the running sum fused into the kernel
            acc = bilinear_resize_nhwc(out, H, W, accumulate=acc)
        # flip commutes with the (linear, symmetric) resize and the sum, so a
        # single un-flip of the flipped half at the end matches the reference.
        y = acc[:N] + jnp.flip(acc[N:], axis=2)
    return jnp.transpose(y, (0, 3, 1, 2))             # NHWC -> NCHW once


forward = jax.jit(_forward_impl, static_argnames=("tta",))


if __name__ == "__main__":
    key = jax.random.PRNGKey(0)
    kp, kx = jax.random.split(key)
    params = init_params(kp)
    x = jax.random.normal(kx, (2, 3, 32, 32), jnp.float32)  # NCHW like PyTorch

    out_plain = jax.block_until_ready(forward(params, x, tta=False))
    assert out_plain.shape == (2, 8, 32, 32)
    assert bool(jnp.all(jnp.isfinite(out_plain)))

    out_tta = jax.block_until_ready(forward(params, x, tta=True))
    assert out_tta.shape == (2, 8, 32, 32)
    assert bool(jnp.all(jnp.isfinite(out_tta)))

    print("KERNEL_OK")
</pallas_src>

<mosaic_0001>
module attributes {stable_mosaic.version = 11 : i64} {
  func.func @_conv_kernel(%arg0: i32, %arg1: memref<1x256x27xbf16, #tpu.memory_space<vmem>>, %arg2: memref<27x16xbf16, #tpu.memory_space<vmem>>, %arg3: memref<1x16xf32, #tpu.memory_space<vmem>>, %arg4: memref<1x256x16xf32, #tpu.memory_space<vmem>>) attributes {dimension_semantics = [#tpu.dimension_semantics<parallel>], iteration_bounds = array<i64: 2>, scalar_prefetch = 0 : i64, scratch_operands = 0 : i64, tpu.core_type = #tpu.core_type<tc>, window_params = [{transform_indices = @transform_0, window_bounds = array<i64: 1, 256, 27>}, {pipeline_mode = #tpu.pipeline_mode<synchronous>, transform_indices = @transform_1, window_bounds = array<i64: 27, 16>}, {pipeline_mode = #tpu.pipeline_mode<synchronous>, transform_indices = @transform_2, window_bounds = array<i64: 1, 16>}, {transform_indices = @transform_3, window_bounds = array<i64: 1, 256, 16>}]} {
    %c0 = arith.constant 0 : index
    %c0_0 = arith.constant 0 : index
    %c0_1 = arith.constant 0 : index
    %0 = vector.load %arg1[%c0, %c0_0, %c0_1] : memref<1x256x27xbf16, #tpu.memory_space<vmem>>, vector<1x256x27xbf16>
    %1 = vector.shape_cast %0 : vector<1x256x27xbf16> to vector<256x27xbf16>
    %c0_2 = arith.constant 0 : index
    %c0_3 = arith.constant 0 : index
    %2 = vector.load %arg2[%c0_2, %c0_3] : memref<27x16xbf16, #tpu.memory_space<vmem>>, vector<27x16xbf16>
    %cst = arith.constant dense<0.000000e+00> : vector<256x16xf32>
    %3 = tpu.matmul %1, %2, %cst {dimension_numbers = #tpu.dot_dimension_numbers<[1], [0], [0], [1], [0, 0, 1, 1], [], []>} : vector<256x27xbf16>, vector<27x16xbf16>, vector<256x16xf32> -> vector<256x16xf32>
    %c0_4 = arith.constant 0 : index
    %c0_5 = arith.constant 0 : index
    %4 = vector.load %arg3[%c0_4, %c0_5] : memref<1x16xf32, #tpu.memory_space<vmem>>, vector<1x16xf32>
    %5 = vector.broadcast %4 : vector<1x16xf32> to vector<256x16xf32>
    %6 = arith.addf %3, %5 : vector<256x16xf32>
    %cst_6 = arith.constant 0.000000e+00 : f32
    %7 = vector.broadcast %cst_6 : f32 to vector<256x16xf32>
    %8 = arith.maximumf %6, %7 : vector<256x16xf32>
    %c0_7 = arith.constant 0 : index
    %c0_8 = arith.constant 0 : index
    %c0_9 = arith.constant 0 : index
    %9 = vector.load %arg4[%c0_7, %c0_8, %c0_9] : memref<1x256x16xf32, #tpu.memory_space<vmem>>, vector<1x256x16xf32>
    %10 = vector.shape_cast %9 : vector<1x256x16xf32> to vector<256x16xf32>
    %11 = vector.shape_cast %8 : vector<256x16xf32> to vector<1x256x16xf32>
    tpu.vector_store %arg4[%c0_7, %c0_8, %c0_9], %11 {strides = array<i32>} : memref<1x256x16xf32, #tpu.memory_space<vmem>>, vector<1x256x16xf32>,
    return
  }
  func.func @transform_0(%arg0: i32) -> (i32, i32, i32) {
    %c0_i32 = arith.constant 0 : i32
    %c0_i32_0 = arith.constant 0 : i32
    %c0_i32_1 = arith.constant 0 : i32
    return %arg0, %c0_i32, %c0_i32_0 : i32, i32, i32
  }
  func.func @transform_1(%arg0: i32) -> (i32, i32) {
    %c0_i32 = arith.constant 0 : i32
    %c0_i32_0 = arith.constant 0 : i32
    %c0_i32_1 = arith.constant 0 : i32
    return %c0_i32, %c0_i32_0 : i32, i32
  }
  func.func @transform_2(%arg0: i32) -> (i32, i32) {
    %c0_i32 = arith.constant 0 : i32
    %c0_i32_0 = arith.constant 0 : i32
    %c0_i32_1 = arith.constant 0 : i32
    return %c0_i32, %c0_i32_0 : i32, i32
  }
  func.func @transform_3(%arg0: i32) -> (i32, i32, i32) {
    %c0_i32 = arith.constant 0 : i32
    %c0_i32_0 = arith.constant 0 : i32
    %c0_i32_1 = arith.constant 0 : i32
    return %arg0, %c0_i32, %c0_i32_0 : i32, i32, i32
  }
}

module attributes {stable_mosaic.version = 11 : i64} {
  func.func @_resize_kernel(%arg0: i32, %arg1: memref<1x8x64xf32, #tpu.memory_space<vmem>>, %arg2: memref<32x8xf32, #tpu.memory_space<vmem>>, %arg3: memref<64x256xf32, #tpu.memory_space<vmem>>, %arg4: memref<1x32x256xf32, #tpu.memory_space<vmem>>) attributes {dimension_semantics = [#tpu.dimension_semantics<parallel>], iteration_bounds = array<i64: 2>, scalar_prefetch = 0 : i64, scratch_operands = 0 : i64, tpu.core_type = #tpu.core_type<tc>, window_params = [{transform_indices = @transform_0, window_bounds = array<i64: 1, 8, 64>}, {pipeline_mode = #tpu.pipeline_mode<synchronous>, transform_indices = @transform_1, window_bounds = array<i64: 32, 8>}, {pipeline_mode = #tpu.pipeline_mode<synchronous>, transform_indices = @transform_2, window_bounds = array<i64: 64, 256>}, {transform_indices = @transform_3, window_bounds = array<i64: 1, 32, 256>}]} {
    %c0 = arith.constant 0 : index
    %c0_0 = arith.constant 0 : index
    %0 = vector.load %arg2[%c0, %c0_0] : memref<32x8xf32, #tpu.memory_space<vmem>>, vector<32x8xf32>
    %c0_1 = arith.constant 0 : index
    %c0_2 = arith.constant 0 : index
    %c0_3 = arith.constant 0 : index
    %1 = vector.load %arg1[%c0_1, %c0_2, %c0_3] : memref<1x8x64xf32, #tpu.memory_space<vmem>>, vector<1x8x64xf32>
    %2 = vector.shape_cast %1 : vector<1x8x64xf32> to vector<8x64xf32>
    %cst = arith.constant dense<0.000000e+00> : vector<32x64xf32>
    %3 = tpu.matmul %0, %2, %cst {dimension_numbers = #tpu.dot_dimension_numbers<[1], [0], [0], [1], [0, 0, 1, 1], [], []>} : vector<32x8xf32>, vector<8x64xf32>, vector<32x64xf32> -> vector<32x64xf32>
    %c0_4 = arith.constant 0 : index
    %c0_5 = arith.constant 0 : index
    %4 = vector.load %arg3[%c0_4, %c0_5] : memref<64x256xf32, #tpu.memory_space<vmem>>, vector<64x256xf32>
    %cst_6 = arith.constant dense<0.000000e+00> : vector<32x256xf32>
    %5 = tpu.matmul %3, %4, %cst_6 {dimension_numbers = #tpu.dot_dimension_numbers<[1], [0], [0], [1], [0, 0, 1, 1], [], []>} : vector<32x64xf32>, vector<64x256xf32>, vector<32x256xf32> -> vector<32x256xf32>
    %c0_7 = arith.constant 0 : index
    %c0_8 = arith.constant 0 : index
    %c0_9 = arith.constant 0 : index
    %6 = vector.load %arg4[%c0_7, %c0_8, %c0_9] : memref<1x32x256xf32, #tpu.memory_space<vmem>>, vector<1x32x256xf32>
    %7 = vector.shape_cast %6 : vector<1x32x256xf32> to vector<32x256xf32>
    %8 = vector.shape_cast %5 : vector<32x256xf32> to vector<1x32x256xf32>
    tpu.vector_store %arg4[%c0_7, %c0_8, %c0_9], %8 {strides = array<i32>} : memref<1x32x256xf32, #tpu.memory_space<vmem>>, vector<1x32x256xf32>,
    return
  }
  func.func @transform_0(%arg0: i32) -> (i32, i32, i32) {
    %c0_i32 = arith.constant 0 : i32
    %c0_i32_0 = arith.constant 0 : i32
    %c0_i32_1 = arith.constant 0 : i32
    return %arg0, %c0_i32, %c0_i32_0 : i32, i32, i32
  }
  func.func @transform_1(%arg0: i32) -> (i32, i32) {
    %c0_i32 = arith.constant 0 : i32
    %c0_i32_0 = arith.constant 0 : i32
    %c0_i32_1 = arith.constant 0 : i32
    return %c0_i32, %c0_i32_0 : i32, i32
  }
  func.func @transform_2(%arg0: i32) -> (i32, i32) {
    %c0_i32 = arith.constant 0 : i32
    %c0_i32_0 = arith.constant 0 : i32
    %c0_i32_1 = arith.constant 0 : i32
    return %c0_i32, %c0_i32_0 : i32, i32
  }
  func.func @transform_3(%arg0: i32) -> (i32, i32, i32) {
    %c0_i32 = arith.constant 0 : i32
    %c0_i32_0 = arith.constant 0 : i32
    %c0_i32_1 = arith.constant 0 : i32
    return %arg0, %c0_i32, %c0_i32_0 : i32, i32, i32
  }
}

module attributes {stable_mosaic.version = 11 : i64} {
  func.func @_conv_kernel(%arg0: i32, %arg1: memref<1x64x144xbf16, #tpu.memory_space<vmem>>, %arg2: memref<144x32xbf16, #tpu.memory_space<vmem>>, %arg3: memref<1x32xf32, #tpu.memory_space<vmem>>, %arg4: memref<32x8xf32, #tpu.memory_space<vmem>>, %arg5: memref<1x8xf32, #tpu.memory_space<vmem>>, %arg6: memref<1x64x8xf32, #tpu.memory_space<vmem>>) attributes {dimension_semantics = [#tpu.dimension_semantics<parallel>], iteration_bounds = array<i64: 2>, scalar_prefetch = 0 : i64, scratch_operands = 0 : i64, tpu.core_type = #tpu.core_type<tc>, window_params = [{transform_indices = @transform_0, window_bounds = array<i64: 1, 64, 144>}, {pipeline_mode = #tpu.pipeline_mode<synchronous>, transform_indices = @transform_1, window_bounds = array<i64: 144, 32>}, {pipeline_mode = #tpu.pipeline_mode<synchronous>, transform_indices = @transform_2, window_bounds = array<i64: 1, 32>}, {pipeline_mode = #tpu.pipeline_mode<synchronous>, transform_indices = @transform_3, window_bounds = array<i64: 32, 8>}, {pipeline_mode = #tpu.pipeline_mode<synchronous>, transform_indices = @transform_4, window_bounds = array<i64: 1, 8>}, {transform_indices = @transform_5, window_bounds = array<i64: 1, 64, 8>}]} {
    %c0 = arith.constant 0 : index
    %c0_0 = arith.constant 0 : index
    %c0_1 = arith.constant 0 : index
    %0 = vector.load %arg1[%c0, %c0_0, %c0_1] : memref<1x64x144xbf16, #tpu.memory_space<vmem>>, vector<1x64x144xbf16>
    %1 = vector.shape_cast %0 : vector<1x64x144xbf16> to vector<64x144xbf16>
    %c0_2 = arith.constant 0 : index
    %c0_3 = arith.constant 0 : index
    %2 = vector.load %arg2[%c0_2, %c0_3] : memref<144x32xbf16, #tpu.memory_space<vmem>>, vector<144x32xbf16>
    %cst = arith.constant dense<0.000000e+00> : vector<64x32xf32>
    %3 = tpu.matmul %1, %2, %cst {dimension_numbers = #tpu.dot_dimension_numbers<[1], [0], [0], [1], [0, 0, 1, 1], [], []>} : vector<64x144xbf16>, vector<144x32xbf16>, vector<64x32xf32> -> vector<64x32xf32>
    %c0_4 = arith.constant 0 : index
    %c0_5 = arith.constant 0 : index
    %4 = vector.load %arg3[%c0_4, %c0_5] : memref<1x32xf32, #tpu.memory_space<vmem>>, vector<1x32xf32>
    %5 = vector.broadcast %4 : vector<1x32xf32> to vector<64x32xf32>
    %6 = arith.addf %3, %5 : vector<64x32xf32>
    %cst_6 = arith.constant 0.000000e+00 : f32
    %7 = vector.broadcast %cst_6 : f32 to vector<64x32xf32>
    %8 = arith.maximumf %6, %7 : vector<64x32xf32>
    %c0_7 = arith.constant 0 : index
    %c0_8 = arith.constant 0 : index
    %9 = vector.load %arg4[%c0_7, %c0_8] : memref<32x8xf32, #tpu.memory_space<vmem>>, vector<32x8xf32>
    %cst_9 = arith.constant dense<0.000000e+00> : vector<64x8xf32>
    %10 = tpu.matmul %8, %9, %cst_9 {dimension_numbers = #tpu.dot_dimension_numbers<[1], [0], [0], [1], [0, 0, 1, 1], [], []>} : vector<64x32xf32>, vector<32x8xf32>, vector<64x8xf32> -> vector<64x8xf32>
    %c0_10 = arith.constant 0 : index
    %c0_11 = arith.constant 0 : index
    %11 = vector.load %arg5[%c0_10, %c0_11] : memref<1x8xf32, #tpu.memory_space<vmem>>, vector<1x8xf32>
    %12 = vector.broadcast %11 : vector<1x8xf32> to vector<64x8xf32>
    %13 = arith.addf %10, %12 : vector<64x8xf32>
    %c0_12 = arith.constant 0 : index
    %c0_13 = arith.constant 0 : index
    %c0_14 = arith.constant 0 : index
    %14 = vector.load %arg6[%c0_12, %c0_13, %c0_14] : memref<1x64x8xf32, #tpu.memory_space<vmem>>, vector<1x64x8xf32>
    %15 = vector.shape_cast %14 : vector<1x64x8xf32> to vector<64x8xf32>
    %16 = vector.shape_cast %13 : vector<64x8xf32> to vector<1x64x8xf32>
    tpu.vector_store %arg6[%c0_12, %c0_13, %c0_14], %16 {strides = array<i32>} : memref<1x64x8xf32, #tpu.memory_space<vmem>>, vector<1x64x8xf32>,
    return
  }
  func.func @transform_0(%arg0: i32) -> (i32, i32, i32) {
    %c0_i32 = arith.constant 0 : i32
    %c0_i32_0 = arith.constant 0 : i32
    %c0_i32_1 = arith.constant 0 : i32
    return %arg0, %c0_i32, %c0_i32_0 : i32, i32, i32
  }
  func.func @transform_1(%arg0: i32) -> (i32, i32) {
    %c0_i32 = arith.constant 0 : i32
    %c0_i32_0 = arith.constant 0 : i32
    %c0_i32_1 = arith.constant 0 : i32
    return %c0_i32, %c0_i32_0 : i32, i32
  }
  func.func @transform_2(%arg0: i32) -> (i32, i32) {
    %c0_i32 = arith.constant 0 : i32
    %c0_i32_0 = arith.constant 0 : i32
    %c0_i32_1 = arith.constant 0 : i32
    return %c0_i32, %c0_i32_0 : i32, i32
  }
  func.func @transform_3(%arg0: i32) -> (i32, i32) {
    %c0_i32 = arith.constant 0 : i32
    %c0_i32_0 = arith.constant 0 : i32
    %c0_i32_1 = arith.constant 0 : i32
    return %c0_i32, %c0_i32_0 : i32, i32
  }
  func.func @transform_4(%arg0: i32) -> (i32, i32) {
    %c0_i32 = arith.constant 0 : i32
    %c0_i32_0 = arith.constant 0 : i32
    %c0_i32_1 = arith.constant 0 : i32
    return %c0_i32, %c0_i32_0 : i32, i32
  }
  func.func @transform_5(%arg0: i32) -> (i32, i32, i32) {
    %c0_i32 = arith.constant 0 : i32
    %c0_i32_0 = arith.constant 0 : i32
    %c0_i32_1 = arith.constant 0 : i32
    return %arg0, %c0_i32, %c0_i32_0 : i32, i32, i32
  }
}

</mosaic_0001>

<llo_original>
// kernel: _forward_impl.3
$region0: #{_forward_impl.3}
  #allocation0 [shape = 'u32[]', space=smem, size = 0x4, offset = 0x4, fixed_abs, tag = 'smem constant byte address 0x4 - core index']
  #allocation1 [shape = 'u32[144,128]{1,0:T(1,128)}', space=vmem, size = 0x12000, scoped, tag = 'internal scratch']
  %s0 = inlined_call_operand.vmem [shape: bf16[2,256,27], index: 0, kind: input, shape index: {}]
  %s1 = inlined_call_operand.vmem [shape: bf16[27,16], index: 1, kind: input, shape index: {}]
  %s2 = inlined_call_operand.vmem [shape: f32[1,16], index: 2, kind: input, shape index: {}]
  %s3 = inlined_call_operand.vmem [shape: f32[2,256,16], index: 3, kind: output, shape index: {}]
  %s4 = sld [smem:[#allocation0]]
  $region45: #{_forward_impl.3} parent=0
    _
  %s6 = ssub.s32 1, %s4
  %s7 = scalar_select 0, %s6, %s4
  loop: start=0, step=1, limit=4
  $region2: #{_forward_impl.3} parent=0 // loop_pre_header
    _
  $region3: #{_forward_impl.3} parent=0 // loop_header
    %s9 = sphi 0, %s13
    %p10 = scmp.ge.s32.totalorder %s9, 4
    %s19 = sphi 0, %s21
    %s22 = sphi 0, %s19
    %s23 = sphi 0, %s22
    %s39 = sphi 0, %s23
    %s43 = sphi 0, %s43
    %s45 = sphi 0, %s43
    %s46 = sphi 0, %s45
    %s60 = sphi 0, %s46
    %s64 = sphi 0, %s64
    %s66 = sphi 0, %s64
    %s67 = sphi 0, %s66
    %s81 = sphi 0, %s67
    %s87 = sphi 0, %s89
    %s90 = sphi 0, %s87
    %s91 = sphi 0, %s90
    %s107 = sphi 0, %s91
  $region4: #{_forward_impl.3} parent=0 // loop_header_branch
    %12 = sbr.rel (%p10) target = $region8
  $region5: #{_forward_impl.3} parent=0 // loop_body
    %s14 = ssub.s32 %s9, 1
    %s15 = ssub.s32 %s9, 2
    %s16 = sadd.s32 %s9, 1
    %s17 = ssub.s32 %s9, %s16
    %p18 = scmp.eq.s32.totalorder %s17, 0
    %s20 = sadd.s32 %s19, 1
    %s21 = scalar_select %p18, %s19, %s20
    %p24 = pneg %p18
    %p25 = scmp.eq.s32.totalorder %s9, 1
    %p26 = por %p24, %p25
    %p27 = scmp.ne.s32.totalorder %s19, %s22
    %p28 = scmp.eq.s32.totalorder %s9, 0
    %p29 = por %p27, %p28
    %p30 = scmp.ne.s32.totalorder %s19, %s22
    %p31 = scmp.eq.s32.totalorder %s14, 1
    %p32 = por %p30, %p31
    %p33 = scmp.ne.s32.totalorder %s22, %s23
    %p34 = scmp.eq.s32.totalorder %s14, 0
    %p35 = por %p33, %p34
    %p36 = scmp.ne.s32.totalorder %s22, %s23
    %p37 = scmp.eq.s32.totalorder %s15, 1
    %p38 = por %p36, %p37
    %p40 = scmp.ne.s32.totalorder %s23, %s39
    %p41 = scmp.eq.s32.totalorder %s15, 0
    %p42 = por %p40, %p41
    %s44 = sadd.s32 %s43, 1
    %p47 = scmp.eq.s32.totalorder %s9, 1
    %p48 = scmp.ne.s32.totalorder %s43, %s45
    %p49 = scmp.eq.s32.totalorder %s9, 0
    %p50 = por %p48, %p49
    %p51 = scmp.ne.s32.totalorder %s43, %s45
    %p52 = scmp.eq.s32.totalorder %s14, 1
    %p53 = por %p51, %p52
    %p54 = scmp.ne.s32.totalorder %s45, %s46
    %p55 = scmp.eq.s32.totalorder %s14, 0
    %p56 = por %p54, %p55
    %p57 = scmp.ne.s32.totalorder %s45, %s46
    %p58 = scmp.eq.s32.totalorder %s15, 1
    %p59 = por %p57, %p58
    %p61 = scmp.ne.s32.totalorder %s46, %s60
    %p62 = scmp.eq.s32.totalorder %s15, 0
    %p63 = por %p61, %p62
    %s65 = sadd.s32 %s64, 1
    %p68 = scmp.eq.s32.totalorder %s9, 1
    %p69 = scmp.ne.s32.totalorder %s64, %s66
    %p70 = scmp.eq.s32.totalorder %s9, 0
    %p71 = por %p69, %p70
    %p72 = scmp.ne.s32.totalorder %s64, %s66
    %p73 = scmp.eq.s32.totalorder %s14, 1
    %p74 = por %p72, %p73
    %p75 = scmp.ne.s32.totalorder %s66, %s67
    %p76 = scmp.eq.s32.totalorder %s14, 0
    %p77 = por %p75, %p76
    %p78 = scmp.ne.s32.totalorder %s66, %s67
    %p79 = scmp.eq.s32.totalorder %s15, 1
    %p80 = por %p78, %p79
    %p82 = scmp.ne.s32.totalorder %s67, %s81
    %p83 = scmp.eq.s32.totalorder %s15, 0
    %p84 = por %p82, %p83
    %s85 = ssub.s32 %s9, %s16
    %p86 = scmp.eq.s32.totalorder %s85, 0
    %s88 = sadd.s32 %s87, 1
    %s89 = scalar_select %p86, %s87, %s88
    %p92 = pneg %p86
    %p93 = scmp.eq.s32.totalorder %s9, 1
    %p94 = por %p92, %p93
    %p95 = scmp.ne.s32.totalorder %s87, %s90
    %p96 = scmp.eq.s32.totalorder %s9, 0
    %p97 = por %p95, %p96
    %p98 = scmp.ne.s32.totalorder %s87, %s90
    %p99 = scmp.eq.s32.totalorder %s14, 1
    %p100 = por %p98, %p99
    %p101 = scmp.ne.s32.totalorder %s90, %s91
    %p102 = scmp.eq.s32.totalorder %s14, 0
    %p103 = por %p101, %p102
    %p104 = scmp.ne.s32.totalorder %s90, %s91
    %p105 = scmp.eq.s32.totalorder %s15, 1
    %p106 = por %p104, %p105
    %p108 = scmp.ne.s32.totalorder %s91, %s107
    %p109 = scmp.eq.s32.totalorder %s15, 0
    %p110 = por %p108, %p109
    %p111 = scmp.le.s32.totalorder 1, %s9
    %p112 = scmp.lt.s32.totalorder %s9, 3
    %p113 = pnand %p111, %p112
    %p114 = pneg %p113
    // Predicated region
    $region9: #{_forward_impl.3} parent=5 // pred_check
      _
    $region10: #{_forward_impl.3} parent=5 // pred_check_branch
      %116 = sbr.rel (%p113) target = $region12
    $region11: #{_forward_impl.3} parent=5 // pred_region
      %s117 = ssub.s32 %s9, 1
      // Predicated region
      $region13: #{_forward_impl.3} parent=11 // pred_check
        %p118 = pneg %p56
      $region14: #{_forward_impl.3} parent=11 // pred_check_branch
        %120 = sbr.rel (%p118) target = $region16
      $region15: #{_forward_impl.3} parent=11 // pred_region
        _
      $region16: #{_forward_impl.3} parent=11 // pred_fallthru
        _
      // Predicated region
      $region17: #{_forward_impl.3} parent=11 // pred_check
        %p121 = pneg %p77
      $region18: #{_forward_impl.3} parent=11 // pred_check_branch
        %123 = sbr.rel (%p121) target = $region20
      $region19: #{_forward_impl.3} parent=11 // pred_region
        _
      $region20: #{_forward_impl.3} parent=11 // pred_fallthru
        _
    $region12: #{_forward_impl.3} parent=5 // pred_fallthru
      _
    %p124 = scmp.lt.s32.totalorder %s9, 2
    // Predicated region
    $region21: #{_forward_impl.3} parent=5 // pred_check
      %p125 = pneg %p124
    $region22: #{_forward_impl.3} parent=5 // pred_check_branch
      %127 = sbr.rel (%p125) target = $region24
    $region23: #{_forward_impl.3} parent=5 // pred_region
      // Predicated region
      $region25: #{_forward_impl.3} parent=23 // pred_check
        %p128 = pneg %p29
      $region26: #{_forward_impl.3} parent=23 // pred_check_branch
        %130 = sbr.rel (%p128) target = $region28
      $region27: #{_forward_impl.3} parent=23 // pred_region
        %p131 = scmp.lt.s32.totalorder %s9, 1
        %s132 = scalar_select %p131, %s9, 1
        %s133 = smul.addr %s132, 32
        %s134 = smul.addr %s133, 4
        %s135 = scalar_lea.vmem %s0, %s134
      $region28: #{_forward_impl.3} parent=23 // pred_fallthru
        _
    $region24: #{_forward_impl.3} parent=5 // pred_fallthru
      _
    %p136 = scmp.le.s32.totalorder 1, %s9
    %p137 = scmp.lt.s32.totalorder %s9, 3
    %p138 = pnand %p136, %p137
    %p139 = pneg %p138
    // Predicated region
    $region29: #{_forward_impl.3} parent=5 // pred_check
      _
    $region30: #{_forward_impl.3} parent=5 // pred_check_branch
      %141 = sbr.rel (%p138) target = $region32
    $region31: #{_forward_impl.3} parent=5 // pred_region
      %s142 = ssub.s32 %s9, 1
      %p143 = scmp.lt.s32.totalorder %s14, 1
      %s144 = scalar_select %p143, %s14, 1
      %s145 = smul.addr %s144, 32
      %s146 = smul.addr %s145, 4
      %s147 = scalar_lea.vmem %s0, %s146
      %p148 = pneg %p35
      %p149 = pneg %p32
      %p150 = pneg %p56
      %p151 = pneg %p53
      %p152 = pneg %p77
      %p153 = pneg %p74
      %p154 = pneg %p103
      %p155 = pneg %p100
      %p156 = scmp.lt.s32.totalorder %s14, 1
      %s157 = scalar_select %p156, %s14, 1
      %s158 = smul.addr %s157, 32
      %s159 = smul.addr %s158, 8
      %s160 = scalar_lea.vmem %s3, %s159
      %p161 = scmp.lt.s32.totalorder %s14, 1
      %s162 = scalar_select %p161, %s14, 1
      %s163 = smul.addr %s162, 32
      %s164 = smul.addr %s163, 4
      %s165 = scalar_lea.vmem %s0, %s164
      %p166 = scmp.lt.s32.totalorder %s14, 1
      %s167 = scalar_select %p166, %s14, 1
      %s168 = smul.addr %s167, 32
      %s169 = smul.addr %s168, 8
      %s170 = scalar_lea.vmem %s3, %s169
      %v172 = vld [vmem:[%s165] sm:$0xf]
      %v173 = vld [vmem:[%s165 + $0x4] sm:$0xf]
      %v174 = vld [vmem:[%s165 + $0x8] sm:$0xf]
      %v175 = vld [vmem:[%s165 + $0xc] sm:$0xf]
      %v176 = vld [vmem:[%s165 + $0x10] sm:$0xf]
      %v177 = vld [vmem:[%s165 + $0x14] sm:$0xf]
      %v178 = vld [vmem:[%s165 + $0x18] sm:$0xf]
      %v179 = vld [vmem:[%s165 + $0x1c] sm:$0xf]
      %v180 = vld [vmem:[%s165 + $0x20] sm:$0xf]
      %v181 = vld [vmem:[%s165 + $0x24] sm:$0xf]
      %v182 = vld [vmem:[%s165 + $0x28] sm:$0xf]
      %v183 = vld [vmem:[%s165 + $0x2c] sm:$0xf]
      %v184 = vld [vmem:[%s165 + $0x30] sm:$0xf]
      %v185 = vld [vmem:[%s165 + $0x34] sm:$0xf]
      %v186 = vld [vmem:[%s165 + $0x38] sm:$0xf]
      %v187 = vld [vmem:[%s165 + $0x3c] sm:$0xf]
      %v188 = vld [vmem:[%s165 + $0x40] sm:$0xf]
      %v189 = vld [vmem:[%s165 + $0x44] sm:$0xf]
      %v190 = vld [vmem:[%s165 + $0x48] sm:$0xf]
      %v191 = vld [vmem:[%s165 + $0x4c] sm:$0xf]
      %v192 = vld [vmem:[%s165 + $0x50] sm:$0xf]
      %v193 = vld [vmem:[%s165 + $0x54] sm:$0xf]
      %v194 = vld [vmem:[%s165 + $0x58] sm:$0xf]
      %v195 = vld [vmem:[%s165 + $0x5c] sm:$0xf]
      %v196 = vld [vmem:[%s165 + $0x60] sm:$0xf]
      %v197 = vld [vmem:[%s165 + $0x64] sm:$0xf]
      %v198 = vld [vmem:[%s165 + $0x68] sm:$0xf]
      %v199 = vld [vmem:[%s165 + $0x6c] sm:$0xf]
      %v200 = vld [vmem:[%s165 + $0x70] sm:$0xf]
      %v201 = vld [vmem:[%s165 + $0x74] sm:$0xf]
      %v202 = vld [vmem:[%s165 + $0x78] sm:$0xf]
      %v203 = vld [vmem:[%s165 + $0x7c] sm:$0xf]
      %v204 = vld [vmem:[%s1] sm:$0xf]
      %v205 = vld [vmem:[%s1 + $0x4] sm:$0xf]
      %v206 = vld [vmem:[%s1 + $0x8] sm:$0xf]
      %v207 = vld [vmem:[%s1 + $0xc] sm:$0x3]
      %v208 = vld [vmem:[%s2] sm:$0x1]
      %v210 = vlaneseq
      %v211 = vshrl.u32 %v210, 7
      %v212 = vsub.s32 0, %v211
      %v213 = vrot.slane %v208, %v212
      %v247 = vunpack.c.l.b16 %v172
      %v248 = vunpack.c.l.b16 %v173
      %v249 = vunpack.c.l.b16 %v174
      %v250 = vunpack.c.l.b16 %v175
      %v251 = vunpack.c.l.b16 %v176
      %v252 = vunpack.c.l.b16 %v177
      %v253 = vunpack.c.l.b16 %v178
      %v254 = vunpack.c.l.b16 %v179
      %v255 = vunpack.c.l.b16 %v180
      %v256 = vunpack.c.l.b16 %v181
      %v257 = vunpack.c.l.b16 %v182
      %v258 = vunpack.c.l.b16 %v183
      %v259 = vunpack.c.l.b16 %v184
      %v260 = vunpack.c.l.b16 %v185
      %v261 = vunpack.c.l.b16 %v186
      %v262 = vunpack.c.l.b16 %v187
      %v263 = vunpack.c.l.b16 %v188
      %v264 = vunpack.c.l.b16 %v189
      %v265 = vunpack.c.l.b16 %v190
      %v266 = vunpack.c.l.b16 %v191
      %v267 = vunpack.c.l.b16 %v192
      %v268 = vunpack.c.l.b16 %v193
      %v269 = vunpack.c.l.b16 %v194
      %v270 = vunpack.c.l.b16 %v195
      %v271 = vunpack.c.l.b16 %v196
      %v272 = vunpack.c.l.b16 %v197
      %v273 = vunpack.c.l.b16 %v198
      %v274 = vunpack.c.l.b16 %v199
      %v275 = vunpack.c.l.b16 %v200
      %v276 = vunpack.c.l.b16 %v201
      %v277 = vunpack.c.l.b16 %v202
      %v278 = vunpack.c.l.b16 %v203
      %v279 = vpack.c.b16 %v248, %v247
      %v280 = vpack.c.b16 %v250, %v249
      %v281 = vpack.c.b16 %v252, %v251
      %v282 = vpack.c.b16 %v254, %v253
      %v283 = vpack.c.b16 %v256, %v255
      %v284 = vpack.c.b16 %v258, %v257
      %v285 = vpack.c.b16 %v260, %v259
      %v286 = vpack.c.b16 %v262, %v261
      %v287 = vpack.c.b16 %v264, %v263
      %v288 = vpack.c.b16 %v266, %v265
      %v289 = vpack.c.b16 %v268, %v267
      %v290 = vpack.c.b16 %v270, %v269
      %v291 = vpack.c.b16 %v272, %v271
      %v292 = vpack.c.b16 %v274, %v273
      %v293 = vpack.c.b16 %v276, %v275
      %v294 = vpack.c.b16 %v278, %v277
      %v299 = vunpack.c.l.b16 %v204
      %v300 = vunpack.c.l.b16 %v205
      %v301 = vunpack.c.l.b16 %v206
      %v302 = vunpack.c.l.b16 %v207
      %v303 = vpack.c.b16 %v300, %v299
      %v304 = vpack.c.b16 %v302, %v301
      %vm306 = vcmask 220160
      %v308 = vsel %vm306, %v279, 0
      %v311 = vsel %vm306, %v280, 0
      %v314 = vsel %vm306, %v281, 0
      %v317 = vsel %vm306, %v282, 0
      %v320 = vsel %vm306, %v283, 0
      %v323 = vsel %vm306, %v284, 0
      %v326 = vsel %vm306, %v285, 0
      %v329 = vsel %vm306, %v286, 0
      %v332 = vsel %vm306, %v287, 0
      %v335 = vsel %vm306, %v288, 0
      %v338 = vsel %vm306, %v289, 0
      %v341 = vsel %vm306, %v290, 0
      %v344 = vsel %vm306, %v291, 0
      %v347 = vsel %vm306, %v292, 0
      %v350 = vsel %vm306, %v293, 0
      %v353 = vsel %vm306, %v294, 0
      %vm355 = vcmask 1044480
      %vm356 = vcmask 1045504
      %v357 = vsel %vm355, 4294967295, 65535
      %v358 = vsel %vm356, %v357, 0
      %v360 = vand.u32 %v304, %v358
      %362 = vmatprep.subr.bf16.mxu0 0
      %363 = vmatpush1.bf16.msra.mxu0 %v303
      %364 = vmatprep.subr.bf16.mxu0 0
      %365 = vmatpush1.bf16.msra.mxu0 %v360
      %366 = vmatprep.subr.bf16.mxu0 0
      %367 = vmatpush1.bf16.msra.mxu0 0
      %368 = vmatprep.subr.bf16.mxu0 0
      %369 = vmatpush1.bf16.msra.mxu0 0
      %370 = vmatprep.subr.bf16.mxu0 0
      %371 = vmatpush1.bf16.msra.mxu0 0
      %372 = vmatprep.subr.bf16.mxu0 0
      %373 = vmatpush1.bf16.msra.mxu0 0
      %374 = vmatprep.subr.bf16.mxu0 0
      %375 = vmatpush1.bf16.msra.mxu0 0
      %376 = vmatprep.subr.bf16.mxu0 0
      %377 = vmatpush1.bf16.msra.mxu0 0
      %378 = vmatprep.subr.bf16.mxu0 0
      %379 = vmatpush1.bf16.msra.mxu0 0
      %380 = vmatprep.subr.bf16.mxu0 0
      %381 = vmatpush1.bf16.msra.mxu0 0
      %382 = vmatprep.subr.bf16.mxu0 0
      %383 = vmatpush1.bf16.msra.mxu0 0
      %384 = vmatprep.subr.bf16.mxu0 0
      %385 = vmatpush1.bf16.msra.mxu0 0
      %386 = vmatprep.subr.bf16.mxu0 0
      %387 = vmatpush1.bf16.msra.mxu0 0
      %388 = vmatprep.subr.bf16.mxu0 0
      %389 = vmatpush1.bf16.msra.mxu0 0
      %390 = vmatprep.subr.bf16.mxu0 0
      %391 = vmatpush1.bf16.msra.mxu0 0
      %392 = vmatprep.subr.bf16.mxu0 0
      %393 = vmatpush1.bf16.msra.mxu0 0
      %394 = vmatprep.mubr.bf16.mxu0 0
      %395 = vmatmul.mubr.bf16.gmra.mrb[0].mxu0 %v308
      %v396 = vpop.f32.mrb[0].mxu0
      %v397 = vadd.f32 %v213, %v396
      %v398 = vpop.f32.mrb[0].mxu0
      %v399 = vpop.f32.mrb[0].mxu0
      %v400 = vadd.f32 %v213, %v399
      %v401 = vpop.f32.mrb[0].mxu0
      %402 = vmatprep.mubr.bf16.mxu0 0
      %403 = vmatmul.mubr.bf16.gmra.mrb[0].mxu0 %v311
      %v404 = vpop.f32.mrb[0].mxu0
      %v405 = vadd.f32 %v213, %v404
      %v406 = vpop.f32.mrb[0].mxu0
      %v407 = vpop.f32.mrb[0].mxu0
      %v408 = vadd.f32 %v213, %v407
      %v409 = vpop.f32.mrb[0].mxu0
      %410 = vmatprep.mubr.bf16.mxu0 0
      %411 = vmatmul.mubr.bf16.gmra.mrb[0].mxu0 %v314
      %v412 = vpop.f32.mrb[0].mxu0
      %v413 = vadd.f32 %v213, %v412
      %v414 = vpop.f32.mrb[0].mxu0
      %v415 = vpop.f32.mrb[0].mxu0
      %v416 = vadd.f32 %v213, %v415
      %v417 = vpop.f32.mrb[0].mxu0
      %418 = vmatprep.mubr.bf16.mxu0 0
      %419 = vmatmul.mubr.bf16.gmra.mrb[0].mxu0 %v317
      %v420 = vpop.f32.mrb[0].mxu0
      %v421 = vadd.f32 %v213, %v420
      %v422 = vpop.f32.mrb[0].mxu0
      %v423 = vpop.f32.mrb[0].mxu0
      %v424 = vadd.f32 %v213, %v423
      %v425 = vpop.f32.mrb[0].mxu0
      %426 = vmatprep.mubr.bf16.mxu0 0
      %427 = vmatmul.mubr.bf16.gmra.mrb[0].mxu0 %v320
      %v428 = vpop.f32.mrb[0].mxu0
      %v429 = vadd.f32 %v213, %v428
      %v430 = vpop.f32.mrb[0].mxu0
      %v431 = vpop.f32.mrb[0].mxu0
      %v432 = vadd.f32 %v213, %v431
      %v433 = vpop.f32.mrb[0].mxu0
      %434 = vmatprep.mubr.bf16.mxu0 0
      %435 = vmatmul.mubr.bf16.gmra.mrb[0].mxu0 %v323
      %v436 = vpop.f32.mrb[0].mxu0
      %v437 = vadd.f32 %v213, %v436
      %v438 = vpop.f32.mrb[0].mxu0
      %v439 = vpop.f32.mrb[0].mxu0
      %v440 = vadd.f32 %v213, %v439
      %v441 = vpop.f32.mrb[0].mxu0
      %442 = vmatprep.mubr.bf16.mxu0 0
      %443 = vmatmul.mubr.bf16.gmra.mrb[0].mxu0 %v326
      %v444 = vpop.f32.mrb[0].mxu0
      %v445 = vadd.f32 %v213, %v444
      %v446 = vpop.f32.mrb[0].mxu0
      %v447 = vpop.f32.mrb[0].mxu0
      %v448 = vadd.f32 %v213, %v447
      %v449 = vpop.f32.mrb[0].mxu0
      %450 = vmatprep.mubr.bf16.mxu0 0
      %451 = vmatmul.mubr.bf16.gmra.mrb[0].mxu0 %v329
      %v452 = vpop.f32.mrb[0].mxu0
      %v453 = vadd.f32 %v213, %v452
      %v454 = vpop.f32.mrb[0].mxu0
      %v455 = vpop.f32.mrb[0].mxu0
      %v456 = vadd.f32 %v213, %v455
      %v457 = vpop.f32.mrb[0].mxu0
      %458 = vmatprep.mubr.bf16.mxu0 0
      %459 = vmatmul.mubr.bf16.gmra.mrb[0].mxu0 %v332
      %v460 = vpop.f32.mrb[0].mxu0
      %v461 = vadd.f32 %v213, %v460
      %v462 = vpop.f32.mrb[0].mxu0
      %v463 = vpop.f32.mrb[0].mxu0
      %v464 = vadd.f32 %v213, %v463
      %v465 = vpop.f32.mrb[0].mxu0
      %466 = vmatprep.mubr.bf16.mxu0 0
      %467 = vmatmul.mubr.bf16.gmra.mrb[0].mxu0 %v335
      %v468 = vpop.f32.mrb[0].mxu0
      %v469 = vadd.f32 %v213, %v468
      %v470 = vpop.f32.mrb[0].mxu0
      %v471 = vpop.f32.mrb[0].mxu0
      %v472 = vadd.f32 %v213, %v471
      %v473 = vpop.f32.mrb[0].mxu0
      %474 = vmatprep.mubr.bf16.mxu0 0
      %475 = vmatmul.mubr.bf16.gmra.mrb[0].mxu0 %v338
      %v476 = vpop.f32.mrb[0].mxu0
      %v477 = vadd.f32 %v213, %v476
      %v478 = vpop.f32.mrb[0].mxu0
      %v479 = vpop.f32.mrb[0].mxu0
      %v480 = vadd.f32 %v213, %v479
      %v481 = vpop.f32.mrb[0].mxu0
      %482 = vmatprep.mubr.bf16.mxu0 0
      %483 = vmatmul.mubr.bf16.gmra.mrb[0].mxu0 %v341
      %v484 = vpop.f32.mrb[0].mxu0
      %v485 = vadd.f32 %v213, %v484
      %v486 = vpop.f32.mrb[0].mxu0
      %v487 = vpop.f32.mrb[0].mxu0
      %v488 = vadd.f32 %v213, %v487
      %v489 = vpop.f32.mrb[0].mxu0
      %490 = vmatprep.mubr.bf16.mxu0 0
      %491 = vmatmul.mubr.bf16.gmra.mrb[0].mxu0 %v344
      %v492 = vpop.f32.mrb[0].mxu0
      %v493 = vadd.f32 %v213, %v492
      %v494 = vpop.f32.mrb[0].mxu0
      %v495 = vpop.f32.mrb[0].mxu0
      %v496 = vadd.f32 %v213, %v495
      %v497 = vpop.f32.mrb[0].mxu0
      %498 = vmatprep.mubr.bf16.mxu0 0
      %499 = vmatmul.mubr.bf16.gmra.mrb[0].mxu0 %v347
      %v500 = vpop.f32.mrb[0].mxu0
      %v501 = vadd.f32 %v213, %v500
      %v502 = vpop.f32.mrb[0].mxu0
      %v503 = vpop.f32.mrb[0].mxu0
      %v504 = vadd.f32 %v213, %v503
      %v505 = vpop.f32.mrb[0].mxu0
      %506 = vmatprep.mubr.bf16.mxu0 0
      %507 = vmatmul.mubr.bf16.gmra.mrb[0].mxu0 %v350
      %v508 = vpop.f32.mrb[0].mxu0
      %v509 = vadd.f32 %v213, %v508
      %v510 = vpop.f32.mrb[0].mxu0
      %v511 = vpop.f32.mrb[0].mxu0
      %v512 = vadd.f32 %v213, %v511
      %v513 = vpop.f32.mrb[0].mxu0
      %514 = vmatprep.mubr.bf16.mxu0 0
      %515 = vmatmul.mubr.bf16.gmra.mrb[0].mxu0 %v353
      %v516 = vpop.f32.mrb[0].mxu0
      %v517 = vadd.f32 %v213, %v516
      %v518 = vpop.f32.mrb[0].mxu0
      %v519 = vpop.f32.mrb[0].mxu0
      %v520 = vadd.f32 %v213, %v519
      %v521 = vpop.f32.mrb[0].mxu0
      %522 = vdwg.mxu0
      %v523 = vmax.f32 %v397, 0.0
      %v524 = vmax.f32 %v400, 0.0
      %v525 = vmax.f32 %v405, 0.0
      %v526 = vmax.f32 %v408, 0.0
      %v527 = vmax.f32 %v413, 0.0
      %v528 = vmax.f32 %v416, 0.0
      %v529 = vmax.f32 %v421, 0.0
      %v530 = vmax.f32 %v424, 0.0
      %v531 = vmax.f32 %v429, 0.0
      %v532 = vmax.f32 %v432, 0.0
      %v533 = vmax.f32 %v437, 0.0
      %v534 = vmax.f32 %v440, 0.0
      %v535 = vmax.f32 %v445, 0.0
      %v536 = vmax.f32 %v448, 0.0
      %v537 = vmax.f32 %v453, 0.0
      %v538 = vmax.f32 %v456, 0.0
      %v539 = vmax.f32 %v461, 0.0
      %v540 = vmax.f32 %v464, 0.0
      %v541 = vmax.f32 %v469, 0.0
      %v542 = vmax.f32 %v472, 0.0
      %v543 = vmax.f32 %v477, 0.0
      %v544 = vmax.f32 %v480, 0.0
      %v545 = vmax.f32 %v485, 0.0
      %v546 = vmax.f32 %v488, 0.0
      %v547 = vmax.f32 %v493, 0.0
      %v548 = vmax.f32 %v496, 0.0
      %v549 = vmax.f32 %v501, 0.0
      %v550 = vmax.f32 %v504, 0.0
      %v551 = vmax.f32 %v509, 0.0
      %v552 = vmax.f32 %v512, 0.0
      %v553 = vmax.f32 %v517, 0.0
      %v554 = vmax.f32 %v520, 0.0
      %vm555 = vcmask 130048
      %556 = vst.msk [vmem:[%s170] sm:$0xff] %vm555, %v523
      %557 = vst.msk [vmem:[%s170 + $0x8] sm:$0xff] %vm555, %v524
      %558 = vst.msk [vmem:[%s170 + $0x10] sm:$0xff] %vm555, %v525
      %559 = vst.msk [vmem:[%s170 + $0x18] sm:$0xff] %vm555, %v526
      %560 = vst.msk [vmem:[%s170 + $0x20] sm:$0xff] %vm555, %v527
      %561 = vst.msk [vmem:[%s170 + $0x28] sm:$0xff] %vm555, %v528
      %562 = vst.msk [vmem:[%s170 + $0x30] sm:$0xff] %vm555, %v529
      %563 = vst.msk [vmem:[%s170 + $0x38] sm:$0xff] %vm555, %v530
      %564 = vst.msk [vmem:[%s170 + $0x40] sm:$0xff] %vm555, %v531
      %565 = vst.msk [vmem:[%s170 + $0x48] sm:$0xff] %vm555, %v532
      %566 = vst.msk [vmem:[%s170 + $0x50] sm:$0xff] %vm555, %v533
      %567 = vst.msk [vmem:[%s170 + $0x58] sm:$0xff] %vm555, %v534
      %568 = vst.msk [vmem:[%s170 + $0x60] sm:$0xff] %vm555, %v535
      %569 = vst.msk [vmem:[%s170 + $0x68] sm:$0xff] %vm555, %v536
      %570 = vst.msk [vmem:[%s170 + $0x70] sm:$0xff] %vm555, %v537
      %571 = vst.msk [vmem:[%s170 + $0x78] sm:$0xff] %vm555, %v538
      %572 = vst.msk [vmem:[%s170 + $0x80] sm:$0xff] %vm555, %v539
      %573 = vst.msk [vmem:[%s170 + $0x88] sm:$0xff] %vm555, %v540
      %574 = vst.msk [vmem:[%s170 + $0x90] sm:$0xff] %vm555, %v541
      %575 = vst.msk [vmem:[%s170 + $0x98] sm:$0xff] %vm555, %v542
      %576 = vst.msk [vmem:[%s170 + $0xa0] sm:$0xff] %vm555, %v543
      %577 = vst.msk [vmem:[%s170 + $0xa8] sm:$0xff] %vm555, %v544
      %578 = vst.msk [vmem:[%s170 + $0xb0] sm:$0xff] %vm555, %v545
      %579 = vst.msk [vmem:[%s170 + $0xb8] sm:$0xff] %vm555, %v546
      %580 = vst.msk [vmem:[%s170 + $0xc0] sm:$0xff] %vm555, %v547
      %581 = vst.msk [vmem:[%s170 + $0xc8] sm:$0xff] %vm555, %v548
      %582 = vst.msk [vmem:[%s170 + $0xd0] sm:$0xff] %vm555, %v549
      %583 = vst.msk [vmem:[%s170 + $0xd8] sm:$0xff] %vm555, %v550
      %584 = vst.msk [vmem:[%s170 + $0xe0] sm:$0xff] %vm555, %v551
      %585 = vst.msk [vmem:[%s170 + $0xe8] sm:$0xff] %vm555, %v552
      %586 = vst.msk [vmem:[%s170 + $0xf0] sm:$0xff] %vm555, %v553
      %587 = vst.msk [vmem:[%s170 + $0xf8] sm:$0xff] %vm555, %v554
      %p588 = scmp.lt.s32.totalorder %s14, 1
      %s589 = scalar_select %p588, %s14, 1
      %s590 = smul.addr %s589, 32
      %s591 = smul.addr %s590, 8
      %s592 = scalar_lea.vmem %s3, %s591
      // Predicated region
      $region33: #{_forward_impl.3} parent=31 // pred_check
        %p593 = pneg %p100
      $region34: #{_forward_impl.3} parent=31 // pred_check_branch
        %595 = sbr.rel (%p593) target = $region36
      $region35: #{_forward_impl.3} parent=31 // pred_region
        _
      $region36: #{_forward_impl.3} parent=31 // pred_fallthru
        _
    $region32: #{_forward_impl.3} parent=5 // pred_fallthru
      _
    %p596 = scmp.le.s32.totalorder 2, %s9
    // Predicated region
    $region37: #{_forward_impl.3} parent=5 // pred_check
      %p597 = pneg %p596
    $region38: #{_forward_impl.3} parent=5 // pred_check_branch
      %599 = sbr.rel (%p597) target = $region40
    $region39: #{_forward_impl.3} parent=5 // pred_region
      %s600 = ssub.s32 %s9, 2
      // Predicated region
      $region41: #{_forward_impl.3} parent=39 // pred_check
        %p601 = pneg %p106
      $region42: #{_forward_impl.3} parent=39 // pred_check_branch
        %603 = sbr.rel (%p601) target = $region44
      $region43: #{_forward_impl.3} parent=39 // pred_region
        %p604 = scmp.lt.s32.totalorder %s15, 1
        %s605 = scalar_select %p604, %s15, 1
        %s606 = smul.addr %s605, 32
        %s607 = smul.addr %s606, 8
        %s608 = scalar_lea.vmem %s3, %s607
      $region44: #{_forward_impl.3} parent=39 // pred_fallthru
        _
    $region40: #{_forward_impl.3} parent=5 // pred_fallthru
      _
  $region6: #{_forward_impl.3} parent=0 // loop_footer
    %s13 = sadd.s32 1, %s9
  $region7: #{_forward_impl.3} parent=0 // loop_footer_branch
    %8 = sbr.rel target = $region3
  $region8: #{_forward_impl.3} parent=0 // loop_exit
    _

// kernel: _forward_impl.5
$region0: #{_forward_impl.5}
  #allocation0 [shape = 'u32[]', space=smem, size = 0x4, offset = 0x4, fixed_abs, tag = 'smem constant byte address 0x4 - core index']
  #allocation1 [shape = 'u32[144,128]{1,0:T(1,128)}', space=vmem, size = 0x12000, scoped, tag = 'internal scratch']
  %s0 = inlined_call_operand.vmem [shape: f32[2,8,64], index: 0, kind: input, shape index: {}]
  %s1 = inlined_call_operand.vmem [shape: f32[32,8], index: 1, kind: input, shape index: {}]
  %s2 = inlined_call_operand.vmem [shape: f32[64,256], index: 2, kind: input, shape index: {}]
  %s3 = inlined_call_operand.vmem [shape: f32[2,32,256], index: 3, kind: output, shape index: {}]
  %s4 = sld [smem:[#allocation0]]
  $region45: #{_forward_impl.5} parent=0
    _
  %s6 = ssub.s32 1, %s4
  %s7 = scalar_select 0, %s6, %s4
  loop: start=0, step=1, limit=4
  $region2: #{_forward_impl.5} parent=0 // loop_pre_header
    _
  $region3: #{_forward_impl.5} parent=0 // loop_header
    %s9 = sphi 0, %s13
    %p10 = scmp.ge.s32.totalorder %s9, 4
    %s19 = sphi 0, %s21
    %s22 = sphi 0, %s19
    %s23 = sphi 0, %s22
    %s39 = sphi 0, %s23
    %s43 = sphi 0, %s43
    %s45 = sphi 0, %s43
    %s46 = sphi 0, %s45
    %s60 = sphi 0, %s46
    %s64 = sphi 0, %s64
    %s66 = sphi 0, %s64
    %s67 = sphi 0, %s66
    %s81 = sphi 0, %s67
    %s87 = sphi 0, %s89
    %s90 = sphi 0, %s87
    %s91 = sphi 0, %s90
    %s107 = sphi 0, %s91
  $region4: #{_forward_impl.5} parent=0 // loop_header_branch
    %12 = sbr.rel (%p10) target = $region8
  $region5: #{_forward_impl.5} parent=0 // loop_body
    %s14 = ssub.s32 %s9, 1
    %s15 = ssub.s32 %s9, 2
    %s16 = sadd.s32 %s9, 1
    %s17 = ssub.s32 %s9, %s16
    %p18 = scmp.eq.s32.totalorder %s17, 0
    %s20 = sadd.s32 %s19, 1
    %s21 = scalar_select %p18, %s19, %s20
    %p24 = pneg %p18
    %p25 = scmp.eq.s32.totalorder %s9, 1
    %p26 = por %p24, %p25
    %p27 = scmp.ne.s32.totalorder %s19, %s22
    %p28 = scmp.eq.s32.totalorder %s9, 0
    %p29 = por %p27, %p28
    %p30 = scmp.ne.s32.totalorder %s19, %s22
    %p31 = scmp.eq.s32.totalorder %s14, 1
    %p32 = por %p30, %p31
    %p33 = scmp.ne.s32.totalorder %s22, %s23
    %p34 = scmp.eq.s32.totalorder %s14, 0
    %p35 = por %p33, %p34
    %p36 = scmp.ne.s32.totalorder %s22, %s23
    %p37 = scmp.eq.s32.totalorder %s15, 1
    %p38 = por %p36, %p37
    %p40 = scmp.ne.s32.totalorder %s23, %s39
    %p41 = scmp.eq.s32.totalorder %s15, 0
    %p42 = por %p40, %p41
    %s44 = sadd.s32 %s43, 1
    %p47 = scmp.eq.s32.totalorder %s9, 1
    %p48 = scmp.ne.s32.totalorder %s43, %s45
    %p49 = scmp.eq.s32.totalorder %s9, 0
    %p50 = por %p48, %p49
    %p51 = scmp.ne.s32.totalorder %s43, %s45
    %p52 = scmp.eq.s32.totalorder %s14, 1
    %p53 = por %p51, %p52
    %p54 = scmp.ne.s32.totalorder %s45, %s46
    %p55 = scmp.eq.s32.totalorder %s14, 0
    %p56 = por %p54, %p55
    %p57 = scmp.ne.s32.totalorder %s45, %s46
    %p58 = scmp.eq.s32.totalorder %s15, 1
    %p59 = por %p57, %p58
    %p61 = scmp.ne.s32.totalorder %s46, %s60
    %p62 = scmp.eq.s32.totalorder %s15, 0
    %p63 = por %p61, %p62
    %s65 = sadd.s32 %s64, 1
    %p68 = scmp.eq.s32.totalorder %s9, 1
    %p69 = scmp.ne.s32.totalorder %s64, %s66
    %p70 = scmp.eq.s32.totalorder %s9, 0
    %p71 = por %p69, %p70
    %p72 = scmp.ne.s32.totalorder %s64, %s66
    %p73 = scmp.eq.s32.totalorder %s14, 1
    %p74 = por %p72, %p73
    %p75 = scmp.ne.s32.totalorder %s66, %s67
    %p76 = scmp.eq.s32.totalorder %s14, 0
    %p77 = por %p75, %p76
    %p78 = scmp.ne.s32.totalorder %s66, %s67
    %p79 = scmp.eq.s32.totalorder %s15, 1
    %p80 = por %p78, %p79
    %p82 = scmp.ne.s32.totalorder %s67, %s81
    %p83 = scmp.eq.s32.totalorder %s15, 0
    %p84 = por %p82, %p83
    %s85 = ssub.s32 %s9, %s16
    %p86 = scmp.eq.s32.totalorder %s85, 0
    %s88 = sadd.s32 %s87, 1
    %s89 = scalar_select %p86, %s87, %s88
    %p92 = pneg %p86
    %p93 = scmp.eq.s32.totalorder %s9, 1
    %p94 = por %p92, %p93
    %p95 = scmp.ne.s32.totalorder %s87, %s90
    %p96 = scmp.eq.s32.totalorder %s9, 0
    %p97 = por %p95, %p96
    %p98 = scmp.ne.s32.totalorder %s87, %s90
    %p99 = scmp.eq.s32.totalorder %s14, 1
    %p100 = por %p98, %p99
    %p101 = scmp.ne.s32.totalorder %s90, %s91
    %p102 = scmp.eq.s32.totalorder %s14, 0
    %p103 = por %p101, %p102
    %p104 = scmp.ne.s32.totalorder %s90, %s91
    %p105 = scmp.eq.s32.totalorder %s15, 1
    %p106 = por %p104, %p105
    %p108 = scmp.ne.s32.totalorder %s91, %s107
    %p109 = scmp.eq.s32.totalorder %s15, 0
    %p110 = por %p108, %p109
    %p111 = scmp.le.s32.totalorder 1, %s9
    %p112 = scmp.lt.s32.totalorder %s9, 3
    %p113 = pnand %p111, %p112
    %p114 = pneg %p113
    // Predicated region
    $region9: #{_forward_impl.5} parent=5 // pred_check
      _
    $region10: #{_forward_impl.5} parent=5 // pred_check_branch
      %116 = sbr.rel (%p113) target = $region12
    $region11: #{_forward_impl.5} parent=5 // pred_region
      %s117 = ssub.s32 %s9, 1
      // Predicated region
      $region13: #{_forward_impl.5} parent=11 // pred_check
        %p118 = pneg %p56
      $region14: #{_forward_impl.5} parent=11 // pred_check_branch
        %120 = sbr.rel (%p118) target = $region16
      $region15: #{_forward_impl.5} parent=11 // pred_region
        _
      $region16: #{_forward_impl.5} parent=11 // pred_fallthru
        _
      // Predicated region
      $region17: #{_forward_impl.5} parent=11 // pred_check
        %p121 = pneg %p77
      $region18: #{_forward_impl.5} parent=11 // pred_check_branch
        %123 = sbr.rel (%p121) target = $region20
      $region19: #{_forward_impl.5} parent=11 // pred_region
        _
      $region20: #{_forward_impl.5} parent=11 // pred_fallthru
        _
    $region12: #{_forward_impl.5} parent=5 // pred_fallthru
      _
    %p124 = scmp.lt.s32.totalorder %s9, 2
    // Predicated region
    $region21: #{_forward_impl.5} parent=5 // pred_check
      %p125 = pneg %p124
    $region22: #{_forward_impl.5} parent=5 // pred_check_branch
      %127 = sbr.rel (%p125) target = $region24
    $region23: #{_forward_impl.5} parent=5 // pred_region
      // Predicated region
      $region25: #{_forward_impl.5} parent=23 // pred_check
        %p128 = pneg %p29
      $region26: #{_forward_impl.5} parent=23 // pred_check_branch
        %130 = sbr.rel (%p128) target = $region28
      $region27: #{_forward_impl.5} parent=23 // pred_region
        %p131 = scmp.lt.s32.totalorder %s9, 1
        %s132 = scalar_select %p131, %s9, 1
        %s133 = smul.addr %s132, 8
        %s134 = scalar_lea.vmem %s0, %s133
      $region28: #{_forward_impl.5} parent=23 // pred_fallthru
        _
    $region24: #{_forward_impl.5} parent=5 // pred_fallthru
      _
    %p135 = scmp.le.s32.totalorder 1, %s9
    %p136 = scmp.lt.s32.totalorder %s9, 3
    %p137 = pnand %p135, %p136
    %p138 = pneg %p137
    // Predicated region
    $region29: #{_forward_impl.5} parent=5 // pred_check
      _
    $region30: #{_forward_impl.5} parent=5 // pred_check_branch
      %140 = sbr.rel (%p137) target = $region32
    $region31: #{_forward_impl.5} parent=5 // pred_region
      %s141 = ssub.s32 %s9, 1
      %p142 = scmp.lt.s32.totalorder %s14, 1
      %s143 = scalar_select %p142, %s14, 1
      %s144 = smul.addr %s143, 8
      %s145 = scalar_lea.vmem %s0, %s144
      %p146 = pneg %p35
      %p147 = pneg %p32
      %p148 = pneg %p56
      %p149 = pneg %p53
      %p150 = pneg %p77
      %p151 = pneg %p74
      %p152 = pneg %p103
      %p153 = pneg %p100
      %p154 = scmp.lt.s32.totalorder %s14, 1
      %s155 = scalar_select %p154, %s14, 1
      %s156 = smul.addr %s155, 8
      %s157 = smul.addr %s156, 8
      %s158 = scalar_lea.vmem %s3, %s157
      %p159 = scmp.lt.s32.totalorder %s14, 1
      %s160 = scalar_select %p159, %s14, 1
      %s161 = smul.addr %s160, 8
      %s162 = scalar_lea.vmem %s0, %s161
      %p163 = scmp.lt.s32.totalorder %s14, 1
      %s164 = scalar_select %p163, %s14, 1
      %s165 = smul.addr %s164, 8
      %s166 = smul.addr %s165, 8
      %s167 = scalar_lea.vmem %s3, %s166
      %v168 = vld [vmem:[%s1] sm:$0xff]
      %v169 = vld [vmem:[%s1 + $0x8] sm:$0xff]
      %v170 = vld [vmem:[%s1 + $0x10] sm:$0xff]
      %v171 = vld [vmem:[%s1 + $0x18] sm:$0xff]
      %v172 = vld [vmem:[%s162] sm:$0xff]
      %vm173 = vcmask 64512
      %v175 = vsel %vm173, %v168, 0
      %v178 = vsel %vm173, %v169, 0
      %v181 = vsel %vm173, %v170, 0
      %v184 = vsel %vm173, %v171, 0
      %186 = vmatprep.subr.mxu0 0.0
      %187 = vmatpush1.msra.mxu0 %v172
      %188 = vmatprep.subr.mxu0 0.0
      %189 = vmatpush1.msra.mxu0 0.0
      %190 = vmatprep.subr.mxu0 0.0
      %191 = vmatpush1.msra.mxu0 0.0
      %192 = vmatprep.subr.mxu0 0.0
      %193 = vmatpush1.msra.mxu0 0.0
      %194 = vmatprep.subr.mxu0 0.0
      %195 = vmatpush1.msra.mxu0 0.0
      %196 = vmatprep.subr.mxu0 0.0
      %197 = vmatpush1.msra.mxu0 0.0
      %198 = vmatprep.subr.mxu0 0.0
      %199 = vmatpush1.msra.mxu0 0.0
      %200 = vmatprep.subr.mxu0 0.0
      %201 = vmatpush1.msra.mxu0 0.0
      %202 = vmatprep.subr.mxu0 0.0
      %203 = vmatpush1.msra.mxu0 0.0
      %204 = vmatprep.subr.mxu0 0.0
      %205 = vmatpush1.msra.mxu0 0.0
      %206 = vmatprep.subr.mxu0 0.0
      %207 = vmatpush1.msra.mxu0 0.0
      %208 = vmatprep.subr.mxu0 0.0
      %209 = vmatpush1.msra.mxu0 0.0
      %210 = vmatprep.subr.mxu0 0.0
      %211 = vmatpush1.msra.mxu0 0.0
      %212 = vmatprep.subr.mxu0 0.0
      %213 = vmatpush1.msra.mxu0 0.0
      %214 = vmatprep.subr.mxu0 0.0
      %215 = vmatpush1.msra.mxu0 0.0
      %216 = vmatprep.subr.mxu0 0.0
      %217 = vmatpush1.msra.mxu0 0.0
      %218 = vmatprep.subr.mxu0 0.0
      %219 = vmatpush1.msra.mxu0 0.0
      %220 = vmatprep.subr.mxu0 0.0
      %221 = vmatpush1.msra.mxu0 0.0
      %222 = vmatprep.subr.mxu0 0.0
      %223 = vmatpush1.msra.mxu0 0.0
      %224 = vmatprep.subr.mxu0 0.0
      %225 = vmatpush1.msra.mxu0 0.0
      %226 = vmatprep.subr.mxu0 0.0
      %227 = vmatpush1.msra.mxu0 0.0
      %228 = vmatprep.subr.mxu0 0.0
      %229 = vmatpush1.msra.mxu0 0.0
      %230 = vmatprep.subr.mxu0 0.0
      %231 = vmatpush1.msra.mxu0 0.0
      %232 = vmatprep.subr.mxu0 0.0
      %233 = vmatpush1.msra.mxu0 0.0
      %234 = vmatprep.subr.mxu0 0.0
      %235 = vmatpush1.msra.mxu0 0.0
      %236 = vmatprep.subr.mxu0 0.0
      %237 = vmatpush1.msra.mxu0 0.0
      %238 = vmatprep.subr.mxu0 0.0
      %239 = vmatpush1.msra.mxu0 0.0
      %240 = vmatprep.subr.mxu0 0.0
      %241 = vmatpush1.msra.mxu0 0.0
      %242 = vmatprep.subr.mxu0 0.0
      %243 = vmatpush1.msra.mxu0 0.0
      %244 = vmatprep.subr.mxu0 0.0
      %245 = vmatpush1.msra.mxu0 0.0
      %246 = vmatprep.subr.mxu0 0.0
      %247 = vmatpush1.msra.mxu0 0.0
      %248 = vmatprep.subr.mxu0 0.0
      %249 = vmatpush1.msra.mxu0 0.0
      %250 = vmatprep.mubr.f32.mxu0 0.0
      %251 = vmatmul.mubr.f32.gmra.mrb[0].mxu0 %v175
      %v252 = vpop.f32.mrb[0].mxu0
      %v253 = vadd.f32 0.0, %v252
      %v254 = vpop.f32.mrb[0].mxu0
      %255 = vmatprep.mubr.f32.mxu0 0.0
      %256 = vmatmul.mubr.f32.gmra.mrb[0].mxu0 %v178
      %v257 = vpop.f32.mrb[0].mxu0
      %v258 = vadd.f32 0.0, %v257
      %v259 = vpop.f32.mrb[0].mxu0
      %260 = vmatprep.mubr.f32.mxu0 0.0
      %261 = vmatmul.mubr.f32.gmra.mrb[0].mxu0 %v181
      %v262 = vpop.f32.mrb[0].mxu0
      %v263 = vadd.f32 0.0, %v262
      %v264 = vpop.f32.mrb[0].mxu0
      %265 = vmatprep.mubr.f32.mxu0 0.0
      %266 = vmatmul.mubr.f32.gmra.mrb[0].mxu0 %v184
      %v267 = vpop.f32.mrb[0].mxu0
      %v268 = vadd.f32 0.0, %v267
      %v269 = vpop.f32.mrb[0].mxu0
      %270 = vdwg.mxu0
      %v271 = vld [vmem:[%s2] sm:$0xff]
      %v272 = vld [vmem:[%s2 + $0x8] sm:$0xff]
      %v273 = vld [vmem:[%s2 + $0x10] sm:$0xff]
      %v274 = vld [vmem:[%s2 + $0x18] sm:$0xff]
      %v275 = vld [vmem:[%s2 + $0x20] sm:$0xff]
      %v276 = vld [vmem:[%s2 + $0x28] sm:$0xff]
      %v277 = vld [vmem:[%s2 + $0x30] sm:$0xff]
      %v278 = vld [vmem:[%s2 + $0x38] sm:$0xff]
      %v279 = vld [vmem:[%s2 + $0x40] sm:$0xff]
      %v280 = vld [vmem:[%s2 + $0x48] sm:$0xff]
      %v281 = vld [vmem:[%s2 + $0x50] sm:$0xff]
      %v282 = vld [vmem:[%s2 + $0x58] sm:$0xff]
      %v283 = vld [vmem:[%s2 + $0x60] sm:$0xff]
      %v284 = vld [vmem:[%s2 + $0x68] sm:$0xff]
      %v285 = vld [vmem:[%s2 + $0x70] sm:$0xff]
      %v286 = vld [vmem:[%s2 + $0x78] sm:$0xff]
      %vm287 = vcmask 523264
      %v289 = vsel %vm287, %v253, 0
      %v292 = vsel %vm287, %v258, 0
      %v295 = vsel %vm287, %v263, 0
      %v298 = vsel %vm287, %v268, 0
      %300 = vmatprep.subr.mxu0 %v272
      %301 = vmatpush1.msra.mxu0 %v271
      %302 = vmatprep.subr.mxu0 %v274
      %303 = vmatpush1.msra.mxu0 %v273
      %304 = vmatprep.subr.mxu0 %v276
      %305 = vmatpush1.msra.mxu0 %v275
      %306 = vmatprep.subr.mxu0 %v278
      %307 = vmatpush1.msra.mxu0 %v277
      %308 = vmatprep.subr.mxu0 %v280
      %309 = vmatpush1.msra.mxu0 %v279
      %310 = vmatprep.subr.mxu0 %v282
      %311 = vmatpush1.msra.mxu0 %v281
      %312 = vmatprep.subr.mxu0 %v284
      %313 = vmatpush1.msra.mxu0 %v283
      %314 = vmatprep.subr.mxu0 %v286
      %315 = vmatpush1.msra.mxu0 %v285
      %316 = vmatprep.subr.mxu0 0.0
      %317 = vmatpush1.msra.mxu0 0.0
      %318 = vmatprep.subr.mxu0 0.0
      %319 = vmatpush1.msra.mxu0 0.0
      %320 = vmatprep.subr.mxu0 0.0
      %321 = vmatpush1.msra.mxu0 0.0
      %322 = vmatprep.subr.mxu0 0.0
      %323 = vmatpush1.msra.mxu0 0.0
      %324 = vmatprep.subr.mxu0 0.0
      %325 = vmatpush1.msra.mxu0 0.0
      %326 = vmatprep.subr.mxu0 0.0
      %327 = vmatpush1.msra.mxu0 0.0
      %328 = vmatprep.subr.mxu0 0.0
      %329 = vmatpush1.msra.mxu0 0.0
      %330 = vmatprep.subr.mxu0 0.0
      %331 = vmatpush1.msra.mxu0 0.0
      %332 = vmatprep.subr.mxu0 0.0
      %333 = vmatpush1.msra.mxu0 0.0
      %334 = vmatprep.subr.mxu0 0.0
      %335 = vmatpush1.msra.mxu0 0.0
      %336 = vmatprep.subr.mxu0 0.0
      %337 = vmatpush1.msra.mxu0 0.0
      %338 = vmatprep.subr.mxu0 0.0
      %339 = vmatpush1.msra.mxu0 0.0
      %340 = vmatprep.subr.mxu0 0.0
      %341 = vmatpush1.msra.mxu0 0.0
      %342 = vmatprep.subr.mxu0 0.0
      %343 = vmatpush1.msra.mxu0 0.0
      %344 = vmatprep.subr.mxu0 0.0
      %345 = vmatpush1.msra.mxu0 0.0
      %346 = vmatprep.subr.mxu0 0.0
      %347 = vmatpush1.msra.mxu0 0.0
      %348 = vmatprep.subr.mxu0 0.0
      %349 = vmatpush1.msra.mxu0 0.0
      %350 = vmatprep.subr.mxu0 0.0
      %351 = vmatpush1.msra.mxu0 0.0
      %352 = vmatprep.subr.mxu0 0.0
      %353 = vmatpush1.msra.mxu0 0.0
      %354 = vmatprep.subr.mxu0 0.0
      %355 = vmatpush1.msra.mxu0 0.0
      %356 = vmatprep.subr.mxu0 0.0
      %357 = vmatpush1.msra.mxu0 0.0
      %358 = vmatprep.subr.mxu0 0.0
      %359 = vmatpush1.msra.mxu0 0.0
      %360 = vmatprep.subr.mxu0 0.0
      %361 = vmatpush1.msra.mxu0 0.0
      %362 = vmatprep.subr.mxu0 0.0
      %363 = vmatpush1.msra.mxu0 0.0
      %364 = vmatprep.mubr.f32.mxu0 0.0
      %365 = vmatmul.mubr.f32.gmra.mrb[0].mxu0 %v289
      %v366 = vpop.f32.mrb[0].mxu0
      %v367 = vadd.f32 0.0, %v366
      %v368 = vpop.f32.mrb[0].mxu0
      %v369 = vadd.f32 0.0, %v368
      %370 = vmatprep.mubr.f32.mxu0 0.0
      %371 = vmatmul.mubr.f32.gmra.mrb[0].mxu0 %v292
      %v372 = vpop.f32.mrb[0].mxu0
      %v373 = vadd.f32 0.0, %v372
      %v374 = vpop.f32.mrb[0].mxu0
      %v375 = vadd.f32 0.0, %v374
      %376 = vmatprep.mubr.f32.mxu0 0.0
      %377 = vmatmul.mubr.f32.gmra.mrb[0].mxu0 %v295
      %v378 = vpop.f32.mrb[0].mxu0
      %v379 = vadd.f32 0.0, %v378
      %v380 = vpop.f32.mrb[0].mxu0
      %v381 = vadd.f32 0.0, %v380
      %382 = vmatprep.mubr.f32.mxu0 0.0
      %383 = vmatmul.mubr.f32.gmra.mrb[0].mxu0 %v298
      %v384 = vpop.f32.mrb[0].mxu0
      %v385 = vadd.f32 0.0, %v384
      %v386 = vpop.f32.mrb[0].mxu0
      %v387 = vadd.f32 0.0, %v386
      %388 = vdwg.mxu0
      %389 = vst [vmem:[%s167] sm:$0xff] %v367
      %390 = vst [vmem:[%s167 + $0x8] sm:$0xff] %v369
      %391 = vst [vmem:[%s167 + $0x10] sm:$0xff] %v373
      %392 = vst [vmem:[%s167 + $0x18] sm:$0xff] %v375
      %393 = vst [vmem:[%s167 + $0x20] sm:$0xff] %v379
      %394 = vst [vmem:[%s167 + $0x28] sm:$0xff] %v381
      %395 = vst [vmem:[%s167 + $0x30] sm:$0xff] %v385
      %396 = vst [vmem:[%s167 + $0x38] sm:$0xff] %v387
      %p397 = scmp.lt.s32.totalorder %s14, 1
      %s398 = scalar_select %p397, %s14, 1
      %s399 = smul.addr %s398, 8
      %s400 = smul.addr %s399, 8
      %s401 = scalar_lea.vmem %s3, %s400
      // Predicated region
      $region33: #{_forward_impl.5} parent=31 // pred_check
        %p402 = pneg %p100
      $region34: #{_forward_impl.5} parent=31 // pred_check_branch
        %404 = sbr.rel (%p402) target = $region36
      $region35: #{_forward_impl.5} parent=31 // pred_region
        _
      $region36: #{_forward_impl.5} parent=31 // pred_fallthru
        _
    $region32: #{_forward_impl.5} parent=5 // pred_fallthru
      _
    %p405 = scmp.le.s32.totalorder 2, %s9
    // Predicated region
    $region37: #{_forward_impl.5} parent=5 // pred_check
      %p406 = pneg %p405
    $region38: #{_forward_impl.5} parent=5 // pred_check_branch
      %408 = sbr.rel (%p406) target = $region40
    $region39: #{_forward_impl.5} parent=5 // pred_region
      %s409 = ssub.s32 %s9, 2
      // Predicated region
      $region41: #{_forward_impl.5} parent=39 // pred_check
        %p410 = pneg %p106
      $region42: #{_forward_impl.5} parent=39 // pred_check_branch
        %412 = sbr.rel (%p410) target = $region44
      $region43: #{_forward_impl.5} parent=39 // pred_region
        %p413 = scmp.lt.s32.totalorder %s15, 1
        %s414 = scalar_select %p413, %s15, 1
        %s415 = smul.addr %s414, 8
        %s416 = smul.addr %s415, 8
        %s417 = scalar_lea.vmem %s3, %s416
      $region44: #{_forward_impl.5} parent=39 // pred_fallthru
        _
    $region40: #{_forward_impl.5} parent=5 // pred_fallthru
      _
  $region6: #{_forward_impl.5} parent=0 // loop_footer
    %s13 = sadd.s32 1, %s9
  $region7: #{_forward_impl.5} parent=0 // loop_footer_branch
    %8 = sbr.rel target = $region3
  $region8: #{_forward_impl.5} parent=0 // loop_exit
    _

// kernel: _forward_impl.4
$region0: #{_forward_impl.4}
  #allocation0 [shape = 'u32[]', space=smem, size = 0x4, offset = 0x4, fixed_abs, tag = 'smem constant byte address 0x4 - core index']
  #allocation1 [shape = 'u32[144,128]{1,0:T(1,128)}', space=vmem, size = 0x12000, scoped, tag = 'internal scratch']
  %s0 = inlined_call_operand.vmem [shape: bf16[2,64,144], index: 0, kind: input, shape index: {}]
  %s1 = inlined_call_operand.vmem [shape: bf16[144,32], index: 1, kind: input, shape index: {}]
  %s2 = inlined_call_operand.vmem [shape: f32[1,32], index: 2, kind: input, shape index: {}]
  %s3 = inlined_call_operand.vmem [shape: f32[32,8], index: 3, kind: input, shape index: {}]
  %s4 = inlined_call_operand.vmem [shape: f32[1,8], index: 4, kind: input, shape index: {}]
  %s5 = inlined_call_operand.vmem [shape: f32[2,64,8], index: 5, kind: output, shape index: {}]
  %s6 = sld [smem:[#allocation0]]
  $region53: #{_forward_impl.4} parent=0
    _
  %s8 = ssub.s32 1, %s6
  %s9 = scalar_select 0, %s8, %s6
  loop: start=0, step=1, limit=4
  $region2: #{_forward_impl.4} parent=0 // loop_pre_header
    _
  $region3: #{_forward_impl.4} parent=0 // loop_header
    %s11 = sphi 0, %s15
    %p12 = scmp.ge.s32.totalorder %s11, 4
    %s21 = sphi 0, %s23
    %s24 = sphi 0, %s21
    %s25 = sphi 0, %s24
    %s41 = sphi 0, %s25
    %s45 = sphi 0, %s45
    %s47 = sphi 0, %s45
    %s48 = sphi 0, %s47
    %s62 = sphi 0, %s48
    %s66 = sphi 0, %s66
    %s68 = sphi 0, %s66
    %s69 = sphi 0, %s68
    %s83 = sphi 0, %s69
    %s87 = sphi 0, %s87
    %s89 = sphi 0, %s87
    %s90 = sphi 0, %s89
    %s104 = sphi 0, %s90
    %s108 = sphi 0, %s108
    %s110 = sphi 0, %s108
    %s111 = sphi 0, %s110
    %s125 = sphi 0, %s111
    %s131 = sphi 0, %s133
    %s134 = sphi 0, %s131
    %s135 = sphi 0, %s134
    %s151 = sphi 0, %s135
  $region4: #{_forward_impl.4} parent=0 // loop_header_branch
    %14 = sbr.rel (%p12) target = $region8
  $region5: #{_forward_impl.4} parent=0 // loop_body
    %s16 = ssub.s32 %s11, 1
    %s17 = ssub.s32 %s11, 2
    %s18 = sadd.s32 %s11, 1
    %s19 = ssub.s32 %s11, %s18
    %p20 = scmp.eq.s32.totalorder %s19, 0
    %s22 = sadd.s32 %s21, 1
    %s23 = scalar_select %p20, %s21, %s22
    %p26 = pneg %p20
    %p27 = scmp.eq.s32.totalorder %s11, 1
    %p28 = por %p26, %p27
    %p29 = scmp.ne.s32.totalorder %s21, %s24
    %p30 = scmp.eq.s32.totalorder %s11, 0
    %p31 = por %p29, %p30
    %p32 = scmp.ne.s32.totalorder %s21, %s24
    %p33 = scmp.eq.s32.totalorder %s16, 1
    %p34 = por %p32, %p33
    %p35 = scmp.ne.s32.totalorder %s24, %s25
    %p36 = scmp.eq.s32.totalorder %s16, 0
    %p37 = por %p35, %p36
    %p38 = scmp.ne.s32.totalorder %s24, %s25
    %p39 = scmp.eq.s32.totalorder %s17, 1
    %p40 = por %p38, %p39
    %p42 = scmp.ne.s32.totalorder %s25, %s41
    %p43 = scmp.eq.s32.totalorder %s17, 0
    %p44 = por %p42, %p43
    %s46 = sadd.s32 %s45, 1
    %p49 = scmp.eq.s32.totalorder %s11, 1
    %p50 = scmp.ne.s32.totalorder %s45, %s47
    %p51 = scmp.eq.s32.totalorder %s11, 0
    %p52 = por %p50, %p51
    %p53 = scmp.ne.s32.totalorder %s45, %s47
    %p54 = scmp.eq.s32.totalorder %s16, 1
    %p55 = por %p53, %p54
    %p56 = scmp.ne.s32.totalorder %s47, %s48
    %p57 = scmp.eq.s32.totalorder %s16, 0
    %p58 = por %p56, %p57
    %p59 = scmp.ne.s32.totalorder %s47, %s48
    %p60 = scmp.eq.s32.totalorder %s17, 1
    %p61 = por %p59, %p60
    %p63 = scmp.ne.s32.totalorder %s48, %s62
    %p64 = scmp.eq.s32.totalorder %s17, 0
    %p65 = por %p63, %p64
    %s67 = sadd.s32 %s66, 1
    %p70 = scmp.eq.s32.totalorder %s11, 1
    %p71 = scmp.ne.s32.totalorder %s66, %s68
    %p72 = scmp.eq.s32.totalorder %s11, 0
    %p73 = por %p71, %p72
    %p74 = scmp.ne.s32.totalorder %s66, %s68
    %p75 = scmp.eq.s32.totalorder %s16, 1
    %p76 = por %p74, %p75
    %p77 = scmp.ne.s32.totalorder %s68, %s69
    %p78 = scmp.eq.s32.totalorder %s16, 0
    %p79 = por %p77, %p78
    %p80 = scmp.ne.s32.totalorder %s68, %s69
    %p81 = scmp.eq.s32.totalorder %s17, 1
    %p82 = por %p80, %p81
    %p84 = scmp.ne.s32.totalorder %s69, %s83
    %p85 = scmp.eq.s32.totalorder %s17, 0
    %p86 = por %p84, %p85
    %s88 = sadd.s32 %s87, 1
    %p91 = scmp.eq.s32.totalorder %s11, 1
    %p92 = scmp.ne.s32.totalorder %s87, %s89
    %p93 = scmp.eq.s32.totalorder %s11, 0
    %p94 = por %p92, %p93
    %p95 = scmp.ne.s32.totalorder %s87, %s89
    %p96 = scmp.eq.s32.totalorder %s16, 1
    %p97 = por %p95, %p96
    %p98 = scmp.ne.s32.totalorder %s89, %s90
    %p99 = scmp.eq.s32.totalorder %s16, 0
    %p100 = por %p98, %p99
    %p101 = scmp.ne.s32.totalorder %s89, %s90
    %p102 = scmp.eq.s32.totalorder %s17, 1
    %p103 = por %p101, %p102
    %p105 = scmp.ne.s32.totalorder %s90, %s104
    %p106 = scmp.eq.s32.totalorder %s17, 0
    %p107 = por %p105, %p106
    %s109 = sadd.s32 %s108, 1
    %p112 = scmp.eq.s32.totalorder %s11, 1
    %p113 = scmp.ne.s32.totalorder %s108, %s110
    %p114 = scmp.eq.s32.totalorder %s11, 0
    %p115 = por %p113, %p114
    %p116 = scmp.ne.s32.totalorder %s108, %s110
    %p117 = scmp.eq.s32.totalorder %s16, 1
    %p118 = por %p116, %p117
    %p119 = scmp.ne.s32.totalorder %s110, %s111
    %p120 = scmp.eq.s32.totalorder %s16, 0
    %p121 = por %p119, %p120
    %p122 = scmp.ne.s32.totalorder %s110, %s111
    %p123 = scmp.eq.s32.totalorder %s17, 1
    %p124 = por %p122, %p123
    %p126 = scmp.ne.s32.totalorder %s111, %s125
    %p127 = scmp.eq.s32.totalorder %s17, 0
    %p128 = por %p126, %p127
    %s129 = ssub.s32 %s11, %s18
    %p130 = scmp.eq.s32.totalorder %s129, 0
    %s132 = sadd.s32 %s131, 1
    %s133 = scalar_select %p130, %s131, %s132
    %p136 = pneg %p130
    %p137 = scmp.eq.s32.totalorder %s11, 1
    %p138 = por %p136, %p137
    %p139 = scmp.ne.s32.totalorder %s131, %s134
    %p140 = scmp.eq.s32.totalorder %s11, 0
    %p141 = por %p139, %p140
    %p142 = scmp.ne.s32.totalorder %s131, %s134
    %p143 = scmp.eq.s32.totalorder %s16, 1
    %p144 = por %p142, %p143
    %p145 = scmp.ne.s32.totalorder %s134, %s135
    %p146 = scmp.eq.s32.totalorder %s16, 0
    %p147 = por %p145, %p146
    %p148 = scmp.ne.s32.totalorder %s134, %s135
    %p149 = scmp.eq.s32.totalorder %s17, 1
    %p150 = por %p148, %p149
    %p152 = scmp.ne.s32.totalorder %s135, %s151
    %p153 = scmp.eq.s32.totalorder %s17, 0
    %p154 = por %p152, %p153
    %p155 = scmp.le.s32.totalorder 1, %s11
    %p156 = scmp.lt.s32.totalorder %s11, 3
    %p157 = pnand %p155, %p156
    %p158 = pneg %p157
    // Predicated region
    $region9: #{_forward_impl.4} parent=5 // pred_check
      _
    $region10: #{_forward_impl.4} parent=5 // pred_check_branch
      %160 = sbr.rel (%p157) target = $region12
    $region11: #{_forward_impl.4} parent=5 // pred_region
      %s161 = ssub.s32 %s11, 1
      // Predicated region
      $region13: #{_forward_impl.4} parent=11 // pred_check
        %p162 = pneg %p58
      $region14: #{_forward_impl.4} parent=11 // pred_check_branch
        %164 = sbr.rel (%p162) target = $region16
      $region15: #{_forward_impl.4} parent=11 // pred_region
        _
      $region16: #{_forward_impl.4} parent=11 // pred_fallthru
        _
      // Predicated region
      $region17: #{_forward_impl.4} parent=11 // pred_check
        %p165 = pneg %p79
      $region18: #{_forward_impl.4} parent=11 // pred_check_branch
        %167 = sbr.rel (%p165) target = $region20
      $region19: #{_forward_impl.4} parent=11 // pred_region
        _
      $region20: #{_forward_impl.4} parent=11 // pred_fallthru
        _
      // Predicated region
      $region21: #{_forward_impl.4} parent=11 // pred_check
        %p168 = pneg %p100
      $region22: #{_forward_impl.4} parent=11 // pred_check_branch
        %170 = sbr.rel (%p168) target = $region24
      $region23: #{_forward_impl.4} parent=11 // pred_region
        _
      $region24: #{_forward_impl.4} parent=11 // pred_fallthru
        _
      // Predicated region
      $region25: #{_forward_impl.4} parent=11 // pred_check
        %p171 = pneg %p121
      $region26: #{_forward_impl.4} parent=11 // pred_check_branch
        %173 = sbr.rel (%p171) target = $region28
      $region27: #{_forward_impl.4} parent=11 // pred_region
        _
      $region28: #{_forward_impl.4} parent=11 // pred_fallthru
        _
    $region12: #{_forward_impl.4} parent=5 // pred_fallthru
      _
    %p174 = scmp.lt.s32.totalorder %s11, 2
    // Predicated region
    $region29: #{_forward_impl.4} parent=5 // pred_check
      %p175 = pneg %p174
    $region30: #{_forward_impl.4} parent=5 // pred_check_branch
      %177 = sbr.rel (%p175) target = $region32
    $region31: #{_forward_impl.4} parent=5 // pred_region
      // Predicated region
      $region33: #{_forward_impl.4} parent=31 // pred_check
        %p178 = pneg %p31
      $region34: #{_forward_impl.4} parent=31 // pred_check_branch
        %180 = sbr.rel (%p178) target = $region36
      $region35: #{_forward_impl.4} parent=31 // pred_region
        %p181 = scmp.lt.s32.totalorder %s11, 1
        %s182 = scalar_select %p181, %s11, 1
        %s183 = smul.addr %s182, 16
        %s184 = smul.addr %s183, 4
        %s185 = scalar_lea.vmem %s0, %s184
      $region36: #{_forward_impl.4} parent=31 // pred_fallthru
        _
    $region32: #{_forward_impl.4} parent=5 // pred_fallthru
      _
    %p186 = scmp.le.s32.totalorder 1, %s11
    %p187 = scmp.lt.s32.totalorder %s11, 3
    %p188 = pnand %p186, %p187
    %p189 = pneg %p188
    // Predicated region
    $region37: #{_forward_impl.4} parent=5 // pred_check
      _
    $region38: #{_forward_impl.4} parent=5 // pred_check_branch
      %191 = sbr.rel (%p188) target = $region40
    $region39: #{_forward_impl.4} parent=5 // pred_region
      %s192 = ssub.s32 %s11, 1
      %p193 = scmp.lt.s32.totalorder %s16, 1
      %s194 = scalar_select %p193, %s16, 1
      %s195 = smul.addr %s194, 16
      %s196 = smul.addr %s195, 4
      %s197 = scalar_lea.vmem %s0, %s196
      %p198 = pneg %p37
      %p199 = pneg %p34
      %p200 = pneg %p58
      %p201 = pneg %p55
      %p202 = pneg %p79
      %p203 = pneg %p76
      %p204 = pneg %p100
      %p205 = pneg %p97
      %p206 = pneg %p121
      %p207 = pneg %p118
      %p208 = pneg %p147
      %p209 = pneg %p144
      %p210 = scmp.lt.s32.totalorder %s16, 1
      %s211 = scalar_select %p210, %s16, 1
      %s212 = smul.addr %s211, 8
      %s213 = smul.addr %s212, 8
      %s214 = scalar_lea.vmem %s5, %s213
      %p215 = scmp.lt.s32.totalorder %s16, 1
      %s216 = scalar_select %p215, %s16, 1
      %s217 = smul.addr %s216, 16
      %s218 = smul.addr %s217, 4
      %s219 = scalar_lea.vmem %s0, %s218
      %p220 = scmp.lt.s32.totalorder %s16, 1
      %s221 = scalar_select %p220, %s16, 1
      %s222 = smul.addr %s221, 8
      %s223 = smul.addr %s222, 8
      %s224 = scalar_lea.vmem %s5, %s223
      %v226 = vld [vmem:[%s219] sm:$0xff]
      %v227 = vld [vmem:[%s219 + $0x8] sm:$0xff]
      %v228 = vld [vmem:[%s219 + $0x10] sm:$0xff]
      %v229 = vld [vmem:[%s219 + $0x18] sm:$0xff]
      %v230 = vld [vmem:[%s219 + $0x20] sm:$0xff]
      %v231 = vld [vmem:[%s219 + $0x28] sm:$0xff]
      %v232 = vld [vmem:[%s219 + $0x30] sm:$0xff]
      %v233 = vld [vmem:[%s219 + $0x38] sm:$0xff]
      %v234 = vld [vmem:[%s1] sm:$0xf]
      %v235 = vld [vmem:[%s1 + $0x4] sm:$0xf]
      %v236 = vld [vmem:[%s1 + $0x8] sm:$0xf]
      %v237 = vld [vmem:[%s1 + $0xc] sm:$0xf]
      %v238 = vld [vmem:[%s1 + $0x10] sm:$0xf]
      %v239 = vld [vmem:[%s1 + $0x14] sm:$0xf]
      %v240 = vld [vmem:[%s1 + $0x18] sm:$0xf]
      %v241 = vld [vmem:[%s1 + $0x1c] sm:$0xf]
      %v242 = vld [vmem:[%s1 + $0x20] sm:$0xf]
      %v243 = vld [vmem:[%s1 + $0x24] sm:$0xf]
      %v244 = vld [vmem:[%s1 + $0x28] sm:$0xf]
      %v245 = vld [vmem:[%s1 + $0x2c] sm:$0xf]
      %v246 = vld [vmem:[%s1 + $0x30] sm:$0xf]
      %v247 = vld [vmem:[%s1 + $0x34] sm:$0xf]
      %v248 = vld [vmem:[%s1 + $0x38] sm:$0xf]
      %v249 = vld [vmem:[%s1 + $0x3c] sm:$0xf]
      %v250 = vld [vmem:[%s1 + $0x40] sm:$0xf]
      %v251 = vld [vmem:[%s1 + $0x44] sm:$0xf]
      %v252 = vld [vmem:[%s2] sm:$0x1]
      %v254 = vlaneseq
      %v255 = vshrl.u32 %v254, 7
      %v256 = vsub.s32 0, %v255
      %v257 = vrot.slane %v252, %v256
      %v267 = vunpack.c.l.b16 %v226
      %v268 = vunpack.c.h.b16 %v226
      %v269 = vunpack.c.l.b16 %v227
      %v270 = vunpack.c.h.b16 %v227
      %v271 = vunpack.c.l.b16 %v228
      %v272 = vunpack.c.h.b16 %v228
      %v273 = vunpack.c.l.b16 %v229
      %v274 = vunpack.c.h.b16 %v229
      %v275 = vunpack.c.l.b16 %v230
      %v276 = vunpack.c.h.b16 %v230
      %v277 = vunpack.c.l.b16 %v231
      %v278 = vunpack.c.h.b16 %v231
      %v279 = vunpack.c.l.b16 %v232
      %v280 = vunpack.c.h.b16 %v232
      %v281 = vunpack.c.l.b16 %v233
      %v282 = vunpack.c.h.b16 %v233
      %v283 = vpack.c.b16 %v269, %v267
      %v284 = vpack.c.b16 %v270, %v268
      %v285 = vpack.c.b16 %v273, %v271
      %v286 = vpack.c.b16 %v274, %v272
      %v287 = vpack.c.b16 %v277, %v275
      %v288 = vpack.c.b16 %v278, %v276
      %v289 = vpack.c.b16 %v281, %v279
      %v290 = vpack.c.b16 %v282, %v280
      %v313 = vunpack.c.l.b16 %v234
      %v314 = vunpack.c.l.b16 %v235
      %v315 = vunpack.c.l.b16 %v236
      %v316 = vunpack.c.l.b16 %v237
      %v317 = vunpack.c.l.b16 %v238
      %v318 = vunpack.c.l.b16 %v239
      %v319 = vunpack.c.l.b16 %v240
      %v320 = vunpack.c.l.b16 %v241
      %v321 = vunpack.c.l.b16 %v242
      %v322 = vunpack.c.l.b16 %v243
      %v323 = vunpack.c.l.b16 %v244
      %v324 = vunpack.c.l.b16 %v245
      %v325 = vunpack.c.l.b16 %v246
      %v326 = vunpack.c.l.b16 %v247
      %v327 = vunpack.c.l.b16 %v248
      %v328 = vunpack.c.l.b16 %v249
      %v329 = vunpack.c.l.b16 %v250
      %v330 = vunpack.c.l.b16 %v251
      %v331 = vpack.c.b16 %v314, %v313
      %v332 = vpack.c.b16 %v316, %v315
      %v333 = vpack.c.b16 %v318, %v317
      %v334 = vpack.c.b16 %v320, %v319
      %v335 = vpack.c.b16 %v322, %v321
      %v336 = vpack.c.b16 %v324, %v323
      %v337 = vpack.c.b16 %v326, %v325
      %v338 = vpack.c.b16 %v328, %v327
      %v339 = vpack.c.b16 %v330, %v329
      %vm349 = vcmask 130048
      %v351 = vsel %vm349, %v284, 0
      %v354 = vsel %vm349, %v286, 0
      %v357 = vsel %vm349, %v288, 0
      %v360 = vsel %vm349, %v290, 0
      %362 = vmatprep.subr.bf16.mxu0 0
      %363 = vmatpush1.bf16.msra.mxu0 %v331
      %364 = vmatprep.subr.bf16.mxu0 0
      %365 = vmatpush1.bf16.msra.mxu0 %v332
      %366 = vmatprep.subr.bf16.mxu0 0
      %367 = vmatpush1.bf16.msra.mxu0 %v333
      %368 = vmatprep.subr.bf16.mxu0 0
      %369 = vmatpush1.bf16.msra.mxu0 %v334
      %370 = vmatprep.subr.bf16.mxu0 0
      %371 = vmatpush1.bf16.msra.mxu0 %v335
      %372 = vmatprep.subr.bf16.mxu0 0
      %373 = vmatpush1.bf16.msra.mxu0 %v336
      %374 = vmatprep.subr.bf16.mxu0 0
      %375 = vmatpush1.bf16.msra.mxu0 %v337
      %376 = vmatprep.subr.bf16.mxu0 0
      %377 = vmatpush1.bf16.msra.mxu0 %v338
      %378 = vmatprep.subr.bf16.mxu0 0
      %379 = vmatpush1.bf16.msra.mxu0 %v339
      %380 = vmatprep.subr.bf16.mxu0 0
      %381 = vmatpush1.bf16.msra.mxu0 0
      %382 = vmatprep.subr.bf16.mxu0 0
      %383 = vmatpush1.bf16.msra.mxu0 0
      %384 = vmatprep.subr.bf16.mxu0 0
      %385 = vmatpush1.bf16.msra.mxu0 0
      %386 = vmatprep.subr.bf16.mxu0 0
      %387 = vmatpush1.bf16.msra.mxu0 0
      %388 = vmatprep.subr.bf16.mxu0 0
      %389 = vmatpush1.bf16.msra.mxu0 0
      %390 = vmatprep.subr.bf16.mxu0 0
      %391 = vmatpush1.bf16.msra.mxu0 0
      %392 = vmatprep.subr.bf16.mxu0 0
      %393 = vmatpush1.bf16.msra.mxu0 0
      %394 = vmatprep.mubr.bf16.mxu0 %v351
      %395 = vmatmul.mubr.bf16.gmra.mrb[0].mxu0 %v283
      %v396 = vpop.f32.mrb[0].mxu0
      %v397 = vadd.f32 %v257, %v396
      %v398 = vpop.f32.mrb[0].mxu0
      %v399 = vpop.f32.mrb[0].mxu0
      %v400 = vadd.f32 %v257, %v399
      %v401 = vpop.f32.mrb[0].mxu0
      %402 = vmatprep.mubr.bf16.mxu0 %v354
      %403 = vmatmul.mubr.bf16.gmra.mrb[0].mxu0 %v285
      %v404 = vpop.f32.mrb[0].mxu0
      %v405 = vadd.f32 %v257, %v404
      %v406 = vpop.f32.mrb[0].mxu0
      %v407 = vpop.f32.mrb[0].mxu0
      %v408 = vadd.f32 %v257, %v407
      %v409 = vpop.f32.mrb[0].mxu0
      %410 = vmatprep.mubr.bf16.mxu0 %v357
      %411 = vmatmul.mubr.bf16.gmra.mrb[0].mxu0 %v287
      %v412 = vpop.f32.mrb[0].mxu0
      %v413 = vadd.f32 %v257, %v412
      %v414 = vpop.f32.mrb[0].mxu0
      %v415 = vpop.f32.mrb[0].mxu0
      %v416 = vadd.f32 %v257, %v415
      %v417 = vpop.f32.mrb[0].mxu0
      %418 = vmatprep.mubr.bf16.mxu0 %v360
      %419 = vmatmul.mubr.bf16.gmra.mrb[0].mxu0 %v289
      %v420 = vpop.f32.mrb[0].mxu0
      %v421 = vadd.f32 %v257, %v420
      %v422 = vpop.f32.mrb[0].mxu0
      %v423 = vpop.f32.mrb[0].mxu0
      %v424 = vadd.f32 %v257, %v423
      %v425 = vpop.f32.mrb[0].mxu0
      %426 = vdwg.mxu0
      %v427 = vmax.f32 %v397, 0.0
      %v428 = vmax.f32 %v400, 0.0
      %v429 = vmax.f32 %v405, 0.0
      %v430 = vmax.f32 %v408, 0.0
      %v431 = vmax.f32 %v413, 0.0
      %v432 = vmax.f32 %v416, 0.0
      %v433 = vmax.f32 %v421, 0.0
      %v434 = vmax.f32 %v424, 0.0
      %v435 = vld [vmem:[%s3] sm:$0xff]
      %v436 = vld [vmem:[%s3 + $0x8] sm:$0xff]
      %v437 = vld [vmem:[%s3 + $0x10] sm:$0xff]
      %v438 = vld [vmem:[%s3 + $0x18] sm:$0xff]
      %v439 = vld [vmem:[%s4] sm:$0x1]
      %v441 = vlaneseq
      %v442 = vshrl.u32 %v441, 7
      %v443 = vsub.s32 0, %v442
      %v444 = vrot.slane %v439, %v443
      %vm446 = vcmask 261120
      %v448 = vsel %vm446, %v427, 0
      %v451 = vsel %vm446, %v428, 0
      %v454 = vsel %vm446, %v429, 0
      %v457 = vsel %vm446, %v430, 0
      %v460 = vsel %vm446, %v431, 0
      %v463 = vsel %vm446, %v432, 0
      %v466 = vsel %vm446, %v433, 0
      %v469 = vsel %vm446, %v434, 0
      %471 = vmatprep.subr.mxu0 0.0
      %472 = vmatpush1.msra.mxu0 %v435
      %473 = vmatprep.subr.mxu0 0.0
      %474 = vmatpush1.msra.mxu0 %v436
      %475 = vmatprep.subr.mxu0 0.0
      %476 = vmatpush1.msra.mxu0 %v437
      %477 = vmatprep.subr.mxu0 0.0
      %478 = vmatpush1.msra.mxu0 %v438
      %479 = vmatprep.subr.mxu0 0.0
      %480 = vmatpush1.msra.mxu0 0.0
      %481 = vmatprep.subr.mxu0 0.0
      %482 = vmatpush1.msra.mxu0 0.0
      %483 = vmatprep.subr.mxu0 0.0
      %484 = vmatpush1.msra.mxu0 0.0
      %485 = vmatprep.subr.mxu0 0.0
      %486 = vmatpush1.msra.mxu0 0.0
      %487 = vmatprep.subr.mxu0 0.0
      %488 = vmatpush1.msra.mxu0 0.0
      %489 = vmatprep.subr.mxu0 0.0
      %490 = vmatpush1.msra.mxu0 0.0
      %491 = vmatprep.subr.mxu0 0.0
      %492 = vmatpush1.msra.mxu0 0.0
      %493 = vmatprep.subr.mxu0 0.0
      %494 = vmatpush1.msra.mxu0 0.0
      %495 = vmatprep.subr.mxu0 0.0
      %496 = vmatpush1.msra.mxu0 0.0
      %497 = vmatprep.subr.mxu0 0.0
      %498 = vmatpush1.msra.mxu0 0.0
      %499 = vmatprep.subr.mxu0 0.0
      %500 = vmatpush1.msra.mxu0 0.0
      %501 = vmatprep.subr.mxu0 0.0
      %502 = vmatpush1.msra.mxu0 0.0
      %503 = vmatprep.subr.mxu0 0.0
      %504 = vmatpush1.msra.mxu0 0.0
      %505 = vmatprep.subr.mxu0 0.0
      %506 = vmatpush1.msra.mxu0 0.0
      %507 = vmatprep.subr.mxu0 0.0
      %508 = vmatpush1.msra.mxu0 0.0
      %509 = vmatprep.subr.mxu0 0.0
      %510 = vmatpush1.msra.mxu0 0.0
      %511 = vmatprep.subr.mxu0 0.0
      %512 = vmatpush1.msra.mxu0 0.0
      %513 = vmatprep.subr.mxu0 0.0
      %514 = vmatpush1.msra.mxu0 0.0
      %515 = vmatprep.subr.mxu0 0.0
      %516 = vmatpush1.msra.mxu0 0.0
      %517 = vmatprep.subr.mxu0 0.0
      %518 = vmatpush1.msra.mxu0 0.0
      %519 = vmatprep.subr.mxu0 0.0
      %520 = vmatpush1.msra.mxu0 0.0
      %521 = vmatprep.subr.mxu0 0.0
      %522 = vmatpush1.msra.mxu0 0.0
      %523 = vmatprep.subr.mxu0 0.0
      %524 = vmatpush1.msra.mxu0 0.0
      %525 = vmatprep.subr.mxu0 0.0
      %526 = vmatpush1.msra.mxu0 0.0
      %527 = vmatprep.subr.mxu0 0.0
      %528 = vmatpush1.msra.mxu0 0.0
      %529 = vmatprep.subr.mxu0 0.0
      %530 = vmatpush1.msra.mxu0 0.0
      %531 = vmatprep.subr.mxu0 0.0
      %532 = vmatpush1.msra.mxu0 0.0
      %533 = vmatprep.subr.mxu0 0.0
      %534 = vmatpush1.msra.mxu0 0.0
      %535 = vmatprep.mubr.f32.mxu0 0.0
      %536 = vmatmul.mubr.f32.gmra.mrb[0].mxu0 %v448
      %v537 = vpop.f32.mrb[0].mxu0
      %v538 = vadd.f32 %v444, %v537
      %v539 = vpop.f32.mrb[0].mxu0
      %540 = vmatprep.mubr.f32.mxu0 0.0
      %541 = vmatmul.mubr.f32.gmra.mrb[0].mxu0 %v451
      %v542 = vpop.f32.mrb[0].mxu0
      %v543 = vadd.f32 %v444, %v542
      %v544 = vpop.f32.mrb[0].mxu0
      %545 = vmatprep.mubr.f32.mxu0 0.0
      %546 = vmatmul.mubr.f32.gmra.mrb[0].mxu0 %v454
      %v547 = vpop.f32.mrb[0].mxu0
      %v548 = vadd.f32 %v444, %v547
      %v549 = vpop.f32.mrb[0].mxu0
      %550 = vmatprep.mubr.f32.mxu0 0.0
      %551 = vmatmul.mubr.f32.gmra.mrb[0].mxu0 %v457
      %v552 = vpop.f32.mrb[0].mxu0
      %v553 = vadd.f32 %v444, %v552
      %v554 = vpop.f32.mrb[0].mxu0
      %555 = vmatprep.mubr.f32.mxu0 0.0
      %556 = vmatmul.mubr.f32.gmra.mrb[0].mxu0 %v460
      %v557 = vpop.f32.mrb[0].mxu0
      %v558 = vadd.f32 %v444, %v557
      %v559 = vpop.f32.mrb[0].mxu0
      %560 = vmatprep.mubr.f32.mxu0 0.0
      %561 = vmatmul.mubr.f32.gmra.mrb[0].mxu0 %v463
      %v562 = vpop.f32.mrb[0].mxu0
      %v563 = vadd.f32 %v444, %v562
      %v564 = vpop.f32.mrb[0].mxu0
      %565 = vmatprep.mubr.f32.mxu0 0.0
      %566 = vmatmul.mubr.f32.gmra.mrb[0].mxu0 %v466
      %v567 = vpop.f32.mrb[0].mxu0
      %v568 = vadd.f32 %v444, %v567
      %v569 = vpop.f32.mrb[0].mxu0
      %570 = vmatprep.mubr.f32.mxu0 0.0
      %571 = vmatmul.mubr.f32.gmra.mrb[0].mxu0 %v469
      %v572 = vpop.f32.mrb[0].mxu0
      %v573 = vadd.f32 %v444, %v572
      %v574 = vpop.f32.mrb[0].mxu0
      %575 = vdwg.mxu0
      %vm576 = vcmask 64512
      %577 = vst.msk [vmem:[%s224] sm:$0xff] %vm576, %v538
      %578 = vst.msk [vmem:[%s224 + $0x8] sm:$0xff] %vm576, %v543
      %579 = vst.msk [vmem:[%s224 + $0x10] sm:$0xff] %vm576, %v548
      %580 = vst.msk [vmem:[%s224 + $0x18] sm:$0xff] %vm576, %v553
      %581 = vst.msk [vmem:[%s224 + $0x20] sm:$0xff] %vm576, %v558
      %582 = vst.msk [vmem:[%s224 + $0x28] sm:$0xff] %vm576, %v563
      %583 = vst.msk [vmem:[%s224 + $0x30] sm:$0xff] %vm576, %v568
      %584 = vst.msk [vmem:[%s224 + $0x38] sm:$0xff] %vm576, %v573
      %p585 = scmp.lt.s32.totalorder %s16, 1
      %s586 = scalar_select %p585, %s16, 1
      %s587 = smul.addr %s586, 8
      %s588 = smul.addr %s587, 8
      %s589 = scalar_lea.vmem %s5, %s588
      // Predicated region
      $region41: #{_forward_impl.4} parent=39 // pred_check
        %p590 = pneg %p144
      $region42: #{_forward_impl.4} parent=39 // pred_check_branch
        %592 = sbr.rel (%p590) target = $region44
      $region43: #{_forward_impl.4} parent=39 // pred_region
        _
      $region44: #{_forward_impl.4} parent=39 // pred_fallthru
        _
    $region40: #{_forward_impl.4} parent=5 // pred_fallthru
      _
    %p593 = scmp.le.s32.totalorder 2, %s11
    // Predicated region
    $region45: #{_forward_impl.4} parent=5 // pred_check
      %p594 = pneg %p593
    $region46: #{_forward_impl.4} parent=5 // pred_check_branch
      %596 = sbr.rel (%p594) target = $region48
    $region47: #{_forward_impl.4} parent=5 // pred_region
      %s597 = ssub.s32 %s11, 2
      // Predicated region
      $region49: #{_forward_impl.4} parent=47 // pred_check
        %p598 = pneg %p150
      $region50: #{_forward_impl.4} parent=47 // pred_check_branch
        %600 = sbr.rel (%p598) target = $region52
      $region51: #{_forward_impl.4} parent=47 // pred_region
        %p601 = scmp.lt.s32.totalorder %s17, 1
        %s602 = scalar_select %p601, %s17, 1
        %s603 = smul.addr %s602, 8
        %s604 = smul.addr %s603, 8
        %s605 = scalar_lea.vmem %s5, %s604
      $region52: #{_forward_impl.4} parent=47 // pred_fallthru
        _
    $region48: #{_forward_impl.4} parent=5 // pred_fallthru
      _
  $region6: #{_forward_impl.4} parent=0 // loop_footer
    %s15 = sadd.s32 1, %s11
  $region7: #{_forward_impl.4} parent=0 // loop_footer_branch
    %10 = sbr.rel target = $region3
  $region8: #{_forward_impl.4} parent=0 // loop_exit
    _

</llo_original>
